<compile_context>
chip_gen: v5e
topology: v5e:2x2
jax: 0.10.0
libtpu: 0.0.40
codegen_flags: <defaults>
</compile_context>

<pallas_src>
import jax
import jax.numpy as jnp
from jax.experimental import pallas as pl
from jax.experimental.pallas import tpu as pltpu


def _discriminator_kernel(x_ref, w1_ref, b1_ref, w2_ref, b2_ref,
                          w3_ref, b3_ref, out_ref):
    # x_ref: (TB, D) tile of the flattened image batch.
    x = x_ref[...].astype(jnp.float32)

    # Layer 1: Linear(D, 512) + LeakyReLU(0.2)   (MXU)
    h1 = jnp.dot(x, w1_ref[...], preferred_element_type=jnp.float32)
    h1 = h1 + b1_ref[...]                      # (TB, 512) + (1, 512)
    h1 = jnp.where(h1 > 0, h1, 0.2 * h1)

    # Layer 2: Linear(512, 256) + LeakyReLU(0.2)  (MXU)
    h2 = jnp.dot(h1, w2_ref[...], preferred_element_type=jnp.float32)
    h2 = h2 + b2_ref[...]                      # (TB, 256) + (1, 256)
    h2 = jnp.where(h2 > 0, h2, 0.2 * h2)

    # Layer 3: Linear(256, 1) + Sigmoid.  N=1 matmul wastes the MXU; do a
    # broadcast-multiply + lane reduction on the VPU/XLU instead.
    logits = jnp.sum(h2 * w3_ref[...], axis=-1, keepdims=True)   # (TB, 1)
    logits = logits + b3_ref[...]                                # + (1, 1)

    # Sigmoid: exp and approx reciprocal both go to the EUP slot.
    out_ref[...] = pl.reciprocal(1.0 + jnp.exp(-logits),
                                 approx=True).astype(out_ref.dtype)


def _round_up(x, m):
    return ((x + m - 1) // m) * m


def _vmem_limit_bytes(tb, d):
    """Rough VMEM budget: double-buffered x/out tiles + pinned weights + acts."""
    f32 = 4
    x_tiles = 2 * tb * d * f32
    out_tiles = 2 * tb * 1 * f32
    weights = (d * 512 + 512 * 256 + 256) * f32
    biases = (512 + 256 + 1) * f32
    acts = tb * (512 + 256 + 1) * f32
    need = x_tiles + out_tiles + 2 * (weights + biases) + acts
    # 2x headroom for compiler scratch; clamp below 64 MiB (v7x physical VMEM).
    return int(min(max(2 * need, 8 << 20), 48 << 20))


def discriminator_forward(img, params, *, tb=512):
    """img: (B, C, H, W) float; params: dict of weights/biases. Returns (B, 1)."""
    B = img.shape[0]
    x = img.reshape(B, -1).astype(jnp.float32)   # row-major, same as torch .view
    D = x.shape[1]

    w1, b1 = params["w1"], params["b1"]          # (D, 512),   (1, 512)
    w2, b2 = params["w2"], params["b2"]          # (512, 256), (1, 256)
    w3, b3 = params["w3"], params["b3"]          # (256, 1),   (1, 1)
    w3_row = jnp.reshape(w3, (1, 256))           # row layout for VPU reduction

    # Batch tile: sublane-aligned (multiple of 8), capped at `tb`.
    TB = max(8, min(tb, _round_up(B, 8)))
    B_pad = pl.cdiv(B, TB) * TB
    if B_pad != B:
        x = jnp.pad(x, ((0, B_pad - B), (0, 0)))

    grid = (B_pad // TB,)

    # x/out tiles walk the batch; weights & biases are pinned (constant block).
    x_spec = pl.BlockSpec((TB, D), lambda i: (i, 0))
    out_spec = pl.BlockSpec((TB, 1), lambda i: (i, 0))
    pinned = lambda shape: pl.BlockSpec(shape, lambda i: (0, 0))

    out = pl.pallas_call(
        _discriminator_kernel,
        out_shape=jax.ShapeDtypeStruct((B_pad, 1), jnp.float32),
        grid=grid,
        in_specs=[
            x_spec,
            pinned(w1.shape), pinned(b1.shape),
            pinned(w2.shape), pinned(b2.shape),
            pinned(w3_row.shape), pinned(b3.shape),
        ],
        out_specs=out_spec,
        compiler_params=pltpu.CompilerParams(
            dimension_semantics=("parallel",),           # 2 TCs on v7x
            vmem_limit_bytes=_vmem_limit_bytes(TB, D),
        ),
    )(x, w1, b1, w2, b2, w3_row, b3)
    return out[:B]


def init_params(key, in_features):
    """Deterministic init mimicking torch.nn.Linear (uniform +/- 1/sqrt(fan_in))."""
    def linear(k, fan_in, fan_out):
        kw, kb = jax.random.split(k)
        bound = 1.0 / jnp.sqrt(jnp.float32(fan_in))
        w = jax.random.uniform(kw, (fan_in, fan_out), jnp.float32, -bound, bound)
        b = jax.random.uniform(kb, (1, fan_out), jnp.float32, -bound, bound)
        return w, b

    k1, k2, k3 = jax.random.split(key, 3)
    w1, b1 = linear(k1, in_features, 512)
    w2, b2 = linear(k2, 512, 256)
    w3, b3 = linear(k3, 256, 1)
    return {"w1": w1, "b1": b1, "w2": w2, "b2": b2, "w3": w3, "b3": b3}


def _reference_forward(img, params):
    """Pure-JAX reference matching the PyTorch module."""
    x = img.reshape(img.shape[0], -1).astype(jnp.float32)
    h1 = x @ params["w1"] + params["b1"]
    h1 = jnp.where(h1 > 0, h1, 0.2 * h1)
    h2 = h1 @ params["w2"] + params["b2"]
    h2 = jnp.where(h2 > 0, h2, 0.2 * h2)
    h3 = h2 @ params["w3"] + params["b3"]
    return jax.nn.sigmoid(h3)


if __name__ == "__main__":
    key = jax.random.PRNGKey(0)
    k_img, k_param = jax.random.split(key)

    # Small image batch: B=2, img_shape=(4, 16, 16) -> D = 1024 features.
    B, C, H, W = 2, 4, 16, 16
    img = jax.random.normal(k_img, (B, C, H, W), jnp.float32)

    params = init_params(k_param, C * H * W)

    out = discriminator_forward(img, params)
    out = jax.block_until_ready(out)

    ref = jax.block_until_ready(_reference_forward(img, params))

    assert out.shape == (B, 1)
    assert jnp.allclose(out, ref, atol=2e-3, rtol=2e-3), (out, ref)
    print("KERNEL_OK")
</pallas_src>

<mosaic_0001>
module attributes {stable_mosaic.version = 11 : i64} {
  func.func @_discriminator_kernel(%arg0: i32, %arg1: memref<8x1024xf32, #tpu.memory_space<vmem>>, %arg2: memref<1024x512xf32, #tpu.memory_space<vmem>>, %arg3: memref<1x512xf32, #tpu.memory_space<vmem>>, %arg4: memref<512x256xf32, #tpu.memory_space<vmem>>, %arg5: memref<1x256xf32, #tpu.memory_space<vmem>>, %arg6: memref<1x256xf32, #tpu.memory_space<vmem>>, %arg7: memref<1x1xf32, #tpu.memory_space<vmem>>, %arg8: memref<8x1xf32, #tpu.memory_space<vmem>>) attributes {dimension_semantics = [#tpu.dimension_semantics<parallel>], iteration_bounds = array<i64: 1>, scalar_prefetch = 0 : i64, scratch_operands = 0 : i64, tpu.core_type = #tpu.core_type<tc>, window_params = [{transform_indices = @transform_0, window_bounds = array<i64: 8, 1024>}, {pipeline_mode = #tpu.pipeline_mode<synchronous>, transform_indices = @transform_1, window_bounds = array<i64: 1024, 512>}, {pipeline_mode = #tpu.pipeline_mode<synchronous>, transform_indices = @transform_2, window_bounds = array<i64: 1, 512>}, {pipeline_mode = #tpu.pipeline_mode<synchronous>, transform_indices = @transform_3, window_bounds = array<i64: 512, 256>}, {pipeline_mode = #tpu.pipeline_mode<synchronous>, transform_indices = @transform_4, window_bounds = array<i64: 1, 256>}, {pipeline_mode = #tpu.pipeline_mode<synchronous>, transform_indices = @transform_5, window_bounds = array<i64: 1, 256>}, {pipeline_mode = #tpu.pipeline_mode<synchronous>, transform_indices = @transform_6, window_bounds = array<i64: 1, 1>}, {transform_indices = @transform_7, window_bounds = array<i64: 8, 1>}]} {
    %c0 = arith.constant 0 : index
    %c0_0 = arith.constant 0 : index
    %0 = vector.load %arg1[%c0, %c0_0] : memref<8x1024xf32, #tpu.memory_space<vmem>>, vector<8x1024xf32>
    %c0_1 = arith.constant 0 : index
    %c0_2 = arith.constant 0 : index
    %1 = vector.load %arg2[%c0_1, %c0_2] : memref<1024x512xf32, #tpu.memory_space<vmem>>, vector<1024x512xf32>
    %cst = arith.constant dense<0.000000e+00> : vector<8x512xf32>
    %2 = tpu.matmul %0, %1, %cst {dimension_numbers = #tpu.dot_dimension_numbers<[1], [0], [0], [1], [0, 0, 1, 1], [], []>} : vector<8x1024xf32>, vector<1024x512xf32>, vector<8x512xf32> -> vector<8x512xf32>
    %c0_3 = arith.constant 0 : index
    %c0_4 = arith.constant 0 : index
    %3 = vector.load %arg3[%c0_3, %c0_4] : memref<1x512xf32, #tpu.memory_space<vmem>>, vector<1x512xf32>
    %4 = vector.broadcast %3 : vector<1x512xf32> to vector<8x512xf32>
    %5 = arith.addf %2, %4 : vector<8x512xf32>
    %cst_5 = arith.constant 0.000000e+00 : f32
    %6 = vector.broadcast %cst_5 : f32 to vector<8x512xf32>
    %7 = arith.cmpf ogt, %5, %6 : vector<8x512xf32>
    %cst_6 = arith.constant 2.000000e-01 : f32
    %8 = vector.broadcast %cst_6 : f32 to vector<8x512xf32>
    %9 = arith.mulf %8, %5 : vector<8x512xf32>
    %10 = arith.select %7, %5, %9 : vector<8x512xi1>, vector<8x512xf32>
    %c0_7 = arith.constant 0 : index
    %c0_8 = arith.constant 0 : index
    %11 = vector.load %arg4[%c0_7, %c0_8] : memref<512x256xf32, #tpu.memory_space<vmem>>, vector<512x256xf32>
    %cst_9 = arith.constant dense<0.000000e+00> : vector<8x256xf32>
    %12 = tpu.matmul %10, %11, %cst_9 {dimension_numbers = #tpu.dot_dimension_numbers<[1], [0], [0], [1], [0, 0, 1, 1], [], []>} : vector<8x512xf32>, vector<512x256xf32>, vector<8x256xf32> -> vector<8x256xf32>
    %c0_10 = arith.constant 0 : index
    %c0_11 = arith.constant 0 : index
    %13 = vector.load %arg5[%c0_10, %c0_11] : memref<1x256xf32, #tpu.memory_space<vmem>>, vector<1x256xf32>
    %14 = vector.broadcast %13 : vector<1x256xf32> to vector<8x256xf32>
    %15 = arith.addf %12, %14 : vector<8x256xf32>
    %cst_12 = arith.constant 0.000000e+00 : f32
    %16 = vector.broadcast %cst_12 : f32 to vector<8x256xf32>
    %17 = arith.cmpf ogt, %15, %16 : vector<8x256xf32>
    %cst_13 = arith.constant 2.000000e-01 : f32
    %18 = vector.broadcast %cst_13 : f32 to vector<8x256xf32>
    %19 = arith.mulf %18, %15 : vector<8x256xf32>
    %20 = arith.select %17, %15, %19 : vector<8x256xi1>, vector<8x256xf32>
    %c0_14 = arith.constant 0 : index
    %c0_15 = arith.constant 0 : index
    %21 = vector.load %arg6[%c0_14, %c0_15] : memref<1x256xf32, #tpu.memory_space<vmem>>, vector<1x256xf32>
    %22 = vector.broadcast %21 : vector<1x256xf32> to vector<8x256xf32>
    %23 = arith.mulf %20, %22 : vector<8x256xf32>
    %cst_16 = arith.constant dense<0.000000e+00> : vector<8xf32>
    %24 = vector.multi_reduction <add>, %23, %cst_16 [1] : vector<8x256xf32> to vector<8xf32>
    %25 = vector.shape_cast %24 : vector<8xf32> to vector<8x1xf32>
    %c0_17 = arith.constant 0 : index
    %c0_18 = arith.constant 0 : index
    %26 = vector.load %arg7[%c0_17, %c0_18] : memref<1x1xf32, #tpu.memory_space<vmem>>, vector<1x1xf32>
    %27 = vector.broadcast %26 : vector<1x1xf32> to vector<8x1xf32>
    %28 = arith.addf %25, %27 : vector<8x1xf32>
    %cst_19 = arith.constant 0.000000e+00 : f32
    %29 = vector.broadcast %cst_19 : f32 to vector<8x1xf32>
    %30 = arith.subf %29, %28 : vector<8x1xf32>
    %31 = math.exp %30 : vector<8x1xf32>
    %cst_20 = arith.constant 1.000000e+00 : f32
    %32 = vector.broadcast %cst_20 : f32 to vector<8x1xf32>
    %33 = arith.addf %32, %31 : vector<8x1xf32>
    %34 = tpu.reciprocal %33 {approx = true} : vector<8x1xf32> -> vector<8x1xf32>
    %c0_21 = arith.constant 0 : index
    %c0_22 = arith.constant 0 : index
    %35 = vector.load %arg8[%c0_21, %c0_22] : memref<8x1xf32, #tpu.memory_space<vmem>>, vector<8x1xf32>
    tpu.vector_store %arg8[%c0_21, %c0_22], %34 {strides = array<i32>} : memref<8x1xf32, #tpu.memory_space<vmem>>, vector<8x1xf32>,
    return
  }
  func.func @transform_0(%arg0: i32) -> (i32, i32) {
    %c0_i32 = arith.constant 0 : i32
    %c0_i32_0 = arith.constant 0 : i32
    return %arg0, %c0_i32 : i32, i32
  }
  func.func @transform_1(%arg0: i32) -> (i32, i32) {
    %c0_i32 = arith.constant 0 : i32
    %c0_i32_0 = arith.constant 0 : i32
    %c0_i32_1 = arith.constant 0 : i32
    return %c0_i32, %c0_i32_0 : i32, i32
  }
  func.func @transform_2(%arg0: i32) -> (i32, i32) {
    %c0_i32 = arith.constant 0 : i32
    %c0_i32_0 = arith.constant 0 : i32
    %c0_i32_1 = arith.constant 0 : i32
    return %c0_i32, %c0_i32_0 : i32, i32
  }
  func.func @transform_3(%arg0: i32) -> (i32, i32) {
    %c0_i32 = arith.constant 0 : i32
    %c0_i32_0 = arith.constant 0 : i32
    %c0_i32_1 = arith.constant 0 : i32
    return %c0_i32, %c0_i32_0 : i32, i32
  }
  func.func @transform_4(%arg0: i32) -> (i32, i32) {
    %c0_i32 = arith.constant 0 : i32
    %c0_i32_0 = arith.constant 0 : i32
    %c0_i32_1 = arith.constant 0 : i32
    return %c0_i32, %c0_i32_0 : i32, i32
  }
  func.func @transform_5(%arg0: i32) -> (i32, i32) {
    %c0_i32 = arith.constant 0 : i32
    %c0_i32_0 = arith.constant 0 : i32
    %c0_i32_1 = arith.constant 0 : i32
    return %c0_i32, %c0_i32_0 : i32, i32
  }
  func.func @transform_6(%arg0: i32) -> (i32, i32) {
    %c0_i32 = arith.constant 0 : i32
    %c0_i32_0 = arith.constant 0 : i32
    %c0_i32_1 = arith.constant 0 : i32
    return %c0_i32, %c0_i32_0 : i32, i32
  }
  func.func @transform_7(%arg0: i32) -> (i32, i32) {
    %c0_i32 = arith.constant 0 : i32
    %c0_i32_0 = arith.constant 0 : i32
    return %arg0, %c0_i32 : i32, i32
  }
}

</mosaic_0001>

<llo_original>
// kernel: tpu_custom_call.1
$region0: #{tpu_custom_call.1}
  #allocation0 [shape = 'u32[]', space=smem, size = 0x4, offset = 0x4, fixed_abs, tag = 'smem constant byte address 0x4 - core index']
  #allocation1 [shape = 'u32[72,128]{1,0:T(1,128)}', space=vmem, size = 0x9000, scoped, tag = 'internal scratch']
  #allocation2 [shape = 'f32[1,1]{1,0:T(1,128)S(1)}', space=vmem, size = 0x200, scoped, tag = 'scoped memory for tpu_custom_call.1']
  %s0 = inlined_call_operand.hbm [shape: f32[8,1024], index: 0, kind: input, shape index: {}]
  %s1 = inlined_call_operand.hbm [shape: f32[1024,512], index: 1, kind: input, shape index: {}]
  %s2 = inlined_call_operand.hbm [shape: f32[1,512], index: 2, kind: input, shape index: {}]
  %s3 = inlined_call_operand.hbm [shape: f32[512,256], index: 3, kind: input, shape index: {}]
  %s4 = inlined_call_operand.hbm [shape: f32[1,256], index: 4, kind: input, shape index: {}]
  %s5 = inlined_call_operand.hbm [shape: f32[1,256], index: 5, kind: input, shape index: {}]
  %s6 = inlined_call_operand.<no memory space> [shape: f32[1,1], index: 6, kind: input, shape index: {}]
  %s7 = inlined_call_operand.vmem [shape: f32[8,1], index: 7, kind: output, shape index: {}]
  %s8 = sld [smem:[#allocation0]]
  $region62: #{tpu_custom_call.1} parent=0
    _
  %s10 = ssub.s32 1, %s8
  %s11 = scalar_select 0, %s10, %s8
  %v12 = vstv %s6
  %13 = vst [vmem:[#allocation2] sm:$0x1] %v12
  $region1: #{tpu_custom_call.1} parent=0
    #allocation3 [shape = 'u8[32768]{0}', space=vmem, size = 0x8000, scoped, tag = 'input window, operand 0, single buffered']
    #allocation4 [shape = 's32[1]{0}', space=sflag, size = 0x4, scoped, tag = 'scoped memory for tpu_custom_call.1']
    #allocation5 [shape = 'u8[2097152]{0}', space=vmem, size = 0x200000, scoped, tag = 'input window, operand 1, single buffered']
    #allocation6 [shape = 's32[1]{0}', space=sflag, size = 0x4, scoped, tag = 'scoped memory for tpu_custom_call.1']
    #allocation7 [shape = 'u8[2048]{0}', space=vmem, size = 0x800, scoped, tag = 'input window, operand 2, single buffered']
    #allocation8 [shape = 'u8[524288]{0}', space=vmem, size = 0x80000, scoped, tag = 'input window, operand 3, single buffered']
    #allocation9 [shape = 's32[1]{0}', space=sflag, size = 0x4, scoped, tag = 'scoped memory for tpu_custom_call.1']
    #allocation10 [shape = 'u8[1024]{0}', space=vmem, size = 0x400, scoped, tag = 'input window, operand 4, single buffered']
    #allocation11 [shape = 'u8[1024]{0}', space=vmem, size = 0x400, scoped, tag = 'input window, operand 5, single buffered']
    #allocation12 [shape = 's32[1]{0}', space=sflag, size = 0x4, scoped, tag = 'scoped memory for tpu_custom_call.1']
    %14 = vsyncpa [#allocation4], 0
    %15 = vsyncpa [#allocation6], 0
    %16 = vsyncpa [#allocation9], 0
    %17 = vsyncpa [#allocation12], 0
    // Predicated region
    $region2: #{tpu_custom_call.1} parent=1 // pred_check
      _
    $region3: #{tpu_custom_call.1} parent=1 // pred_check_branch
      %19 = sbr.rel (0) target = $region5
    $region4: #{tpu_custom_call.1} parent=1 // pred_region
      %21 = vsyncadd [#allocation4], 0
      %s23 = sshll.u32 %s0, 4
      %s24 = int_to_ptr.hbm [resolvable:$true] %s23
      %s25 = sshll.u32 [#allocation3], 4
      %s26 = int_to_ptr.vmem [resolvable:$true] %s25
      %28 = dma.hbm_to_vmem [thread:$0]  %s24, 1024, %s26, [#allocation4]
    $region5: #{tpu_custom_call.1} parent=1 // pred_fallthru
      _
    // Predicated region
    $region6: #{tpu_custom_call.1} parent=1 // pred_check
      _
    $region7: #{tpu_custom_call.1} parent=1 // pred_check_branch
      %30 = sbr.rel (0) target = $region9
    $region8: #{tpu_custom_call.1} parent=1 // pred_region
      %32 = vsyncadd [#allocation6], 0
      %s33 = sshll.u32 %s1, 4
      %s34 = int_to_ptr.hbm [resolvable:$true] %s33
      %s35 = sshll.u32 [#allocation5], 4
      %s36 = int_to_ptr.vmem [resolvable:$true] %s35
      %41 = dma.hbm_to_vmem [thread:$0]  %s34, 65536, %s36, [#allocation6], 512, 512, 32
    $region9: #{tpu_custom_call.1} parent=1 // pred_fallthru
      _
    // Predicated region
    $region10: #{tpu_custom_call.1} parent=1 // pred_check
      _
    $region11: #{tpu_custom_call.1} parent=1 // pred_check_branch
      %43 = sbr.rel (0) target = $region13
    $region12: #{tpu_custom_call.1} parent=1 // pred_region
      %45 = vsyncadd [#allocation6], 0
      %s47 = sshll.u32 %s2, 4
      %s48 = int_to_ptr.hbm [resolvable:$true] %s47
      %s49 = sshll.u32 [#allocation7], 4
      %s50 = int_to_ptr.vmem [resolvable:$true] %s49
      %52 = dma.hbm_to_vmem [thread:$0]  %s48, 64, %s50, [#allocation6]
    $region13: #{tpu_custom_call.1} parent=1 // pred_fallthru
      _
    // Predicated region
    $region14: #{tpu_custom_call.1} parent=1 // pred_check
      _
    $region15: #{tpu_custom_call.1} parent=1 // pred_check_branch
      %54 = sbr.rel (0) target = $region17
    $region16: #{tpu_custom_call.1} parent=1 // pred_region
      %56 = vsyncadd [#allocation9], 0
      %s57 = sshll.u32 %s3, 4
      %s58 = int_to_ptr.hbm [resolvable:$true] %s57
      %s59 = sshll.u32 [#allocation8], 4
      %s60 = int_to_ptr.vmem [resolvable:$true] %s59
      %65 = dma.hbm_to_vmem [thread:$0]  %s58, 16384, %s60, [#allocation9], 256, 256, 16
    $region17: #{tpu_custom_call.1} parent=1 // pred_fallthru
      _
    // Predicated region
    $region18: #{tpu_custom_call.1} parent=1 // pred_check
      _
    $region19: #{tpu_custom_call.1} parent=1 // pred_check_branch
      %67 = sbr.rel (0) target = $region21
    $region20: #{tpu_custom_call.1} parent=1 // pred_region
      %69 = vsyncadd [#allocation9], 0
      %s71 = sshll.u32 %s4, 4
      %s72 = int_to_ptr.hbm [resolvable:$true] %s71
      %s73 = sshll.u32 [#allocation10], 4
      %s74 = int_to_ptr.vmem [resolvable:$true] %s73
      %76 = dma.hbm_to_vmem [thread:$0]  %s72, 32, %s74, [#allocation9]
    $region21: #{tpu_custom_call.1} parent=1 // pred_fallthru
      _
    // Predicated region
    $region22: #{tpu_custom_call.1} parent=1 // pred_check
      _
    $region23: #{tpu_custom_call.1} parent=1 // pred_check_branch
      %78 = sbr.rel (0) target = $region25
    $region24: #{tpu_custom_call.1} parent=1 // pred_region
      %80 = vsyncadd [#allocation12], 0
      %s82 = sshll.u32 %s5, 4
      %s83 = int_to_ptr.hbm [resolvable:$true] %s82
      %s84 = sshll.u32 [#allocation11], 4
      %s85 = int_to_ptr.vmem [resolvable:$true] %s84
      %87 = dma.hbm_to_vmem [thread:$0]  %s83, 32, %s85, [#allocation12]
    $region25: #{tpu_custom_call.1} parent=1 // pred_fallthru
      _
    // Predicated region
    $region26: #{tpu_custom_call.1} parent=1 // pred_check
      _
    $region27: #{tpu_custom_call.1} parent=1 // pred_check_branch
      %89 = sbr.rel (0) target = $region29
    $region28: #{tpu_custom_call.1} parent=1 // pred_region
      _
    $region29: #{tpu_custom_call.1} parent=1 // pred_fallthru
      _
    // Predicated region
    $region30: #{tpu_custom_call.1} parent=1 // pred_check
      _
    $region31: #{tpu_custom_call.1} parent=1 // pred_check_branch
      %91 = sbr.rel (0) target = $region33
    $region32: #{tpu_custom_call.1} parent=1 // pred_region
      %93 = dma.done [#allocation4], 1024
    $region33: #{tpu_custom_call.1} parent=1 // pred_fallthru
      _
    // Predicated region
    $region34: #{tpu_custom_call.1} parent=1 // pred_check
      _
    $region35: #{tpu_custom_call.1} parent=1 // pred_check_branch
      %95 = sbr.rel (0) target = $region37
    $region36: #{tpu_custom_call.1} parent=1 // pred_region
      %97 = dma.done [#allocation6], 65536
    $region37: #{tpu_custom_call.1} parent=1 // pred_fallthru
      _
    // Predicated region
    $region38: #{tpu_custom_call.1} parent=1 // pred_check
      _
    $region39: #{tpu_custom_call.1} parent=1 // pred_check_branch
      %99 = sbr.rel (0) target = $region41
    $region40: #{tpu_custom_call.1} parent=1 // pred_region
      %101 = dma.done [#allocation6], 64
    $region41: #{tpu_custom_call.1} parent=1 // pred_fallthru
      _
    // Predicated region
    $region42: #{tpu_custom_call.1} parent=1 // pred_check
      _
    $region43: #{tpu_custom_call.1} parent=1 // pred_check_branch
      %103 = sbr.rel (0) target = $region45
    $region44: #{tpu_custom_call.1} parent=1 // pred_region
      %105 = dma.done [#allocation9], 16384
    $region45: #{tpu_custom_call.1} parent=1 // pred_fallthru
      _
    // Predicated region
    $region46: #{tpu_custom_call.1} parent=1 // pred_check
      _
    $region47: #{tpu_custom_call.1} parent=1 // pred_check_branch
      %107 = sbr.rel (0) target = $region49
    $region48: #{tpu_custom_call.1} parent=1 // pred_region
      %109 = dma.done [#allocation9], 32
    $region49: #{tpu_custom_call.1} parent=1 // pred_fallthru
      _
    // Predicated region
    $region50: #{tpu_custom_call.1} parent=1 // pred_check
      _
    $region51: #{tpu_custom_call.1} parent=1 // pred_check_branch
      %111 = sbr.rel (0) target = $region53
    $region52: #{tpu_custom_call.1} parent=1 // pred_region
      %113 = dma.done [#allocation12], 32
    $region53: #{tpu_custom_call.1} parent=1 // pred_fallthru
      _
    %v114 = vld [vmem:[#allocation3] sm:$0xff]
    %v115 = vld [vmem:[#allocation3 + $0x8] sm:$0xff]
    %v116 = vld [vmem:[#allocation3 + $0x10] sm:$0xff]
    %v117 = vld [vmem:[#allocation3 + $0x18] sm:$0xff]
    %v118 = vld [vmem:[#allocation3 + $0x20] sm:$0xff]
    %v119 = vld [vmem:[#allocation3 + $0x28] sm:$0xff]
    %v120 = vld [vmem:[#allocation3 + $0x30] sm:$0xff]
    %v121 = vld [vmem:[#allocation3 + $0x38] sm:$0xff]
    %v122 = vld [vmem:[#allocation5] sm:$0xff]
    %v123 = vld [vmem:[#allocation5 + $0x8] sm:$0xff]
    %v124 = vld [vmem:[#allocation5 + $0x10] sm:$0xff]
    %v125 = vld [vmem:[#allocation5 + $0x18] sm:$0xff]
    %v126 = vld [vmem:[#allocation5 + $0x20] sm:$0xff]
    %v127 = vld [vmem:[#allocation5 + $0x28] sm:$0xff]
    %v128 = vld [vmem:[#allocation5 + $0x30] sm:$0xff]
    %v129 = vld [vmem:[#allocation5 + $0x38] sm:$0xff]
    %v130 = vld [vmem:[#allocation5 + $0x40] sm:$0xff]
    %v131 = vld [vmem:[#allocation5 + $0x48] sm:$0xff]
    %v132 = vld [vmem:[#allocation5 + $0x50] sm:$0xff]
    %v133 = vld [vmem:[#allocation5 + $0x58] sm:$0xff]
    %v134 = vld [vmem:[#allocation5 + $0x60] sm:$0xff]
    %v135 = vld [vmem:[#allocation5 + $0x68] sm:$0xff]
    %v136 = vld [vmem:[#allocation5 + $0x70] sm:$0xff]
    %v137 = vld [vmem:[#allocation5 + $0x78] sm:$0xff]
    %v138 = vld [vmem:[#allocation5 + $0x80] sm:$0xff]
    %v139 = vld [vmem:[#allocation5 + $0x88] sm:$0xff]
    %v140 = vld [vmem:[#allocation5 + $0x90] sm:$0xff]
    %v141 = vld [vmem:[#allocation5 + $0x98] sm:$0xff]
    %v142 = vld [vmem:[#allocation5 + $0xa0] sm:$0xff]
    %v143 = vld [vmem:[#allocation5 + $0xa8] sm:$0xff]
    %v144 = vld [vmem:[#allocation5 + $0xb0] sm:$0xff]
    %v145 = vld [vmem:[#allocation5 + $0xb8] sm:$0xff]
    %v146 = vld [vmem:[#allocation5 + $0xc0] sm:$0xff]
    %v147 = vld [vmem:[#allocation5 + $0xc8] sm:$0xff]
    %v148 = vld [vmem:[#allocation5 + $0xd0] sm:$0xff]
    %v149 = vld [vmem:[#allocation5 + $0xd8] sm:$0xff]
    %v150 = vld [vmem:[#allocation5 + $0xe0] sm:$0xff]
    %v151 = vld [vmem:[#allocation5 + $0xe8] sm:$0xff]
    %v152 = vld [vmem:[#allocation5 + $0xf0] sm:$0xff]
    %v153 = vld [vmem:[#allocation5 + $0xf8] sm:$0xff]
    %v154 = vld [vmem:[#allocation5 + $0x100] sm:$0xff]
    %v155 = vld [vmem:[#allocation5 + $0x108] sm:$0xff]
    %v156 = vld [vmem:[#allocation5 + $0x110] sm:$0xff]
    %v157 = vld [vmem:[#allocation5 + $0x118] sm:$0xff]
    %v158 = vld [vmem:[#allocation5 + $0x120] sm:$0xff]
    %v159 = vld [vmem:[#allocation5 + $0x128] sm:$0xff]
    %v160 = vld [vmem:[#allocation5 + $0x130] sm:$0xff]
    %v161 = vld [vmem:[#allocation5 + $0x138] sm:$0xff]
    %v162 = vld [vmem:[#allocation5 + $0x140] sm:$0xff]
    %v163 = vld [vmem:[#allocation5 + $0x148] sm:$0xff]
    %v164 = vld [vmem:[#allocation5 + $0x150] sm:$0xff]
    %v165 = vld [vmem:[#allocation5 + $0x158] sm:$0xff]
    %v166 = vld [vmem:[#allocation5 + $0x160] sm:$0xff]
    %v167 = vld [vmem:[#allocation5 + $0x168] sm:$0xff]
    %v168 = vld [vmem:[#allocation5 + $0x170] sm:$0xff]
    %v169 = vld [vmem:[#allocation5 + $0x178] sm:$0xff]
    %v170 = vld [vmem:[#allocation5 + $0x180] sm:$0xff]
    %v171 = vld [vmem:[#allocation5 + $0x188] sm:$0xff]
    %v172 = vld [vmem:[#allocation5 + $0x190] sm:$0xff]
    %v173 = vld [vmem:[#allocation5 + $0x198] sm:$0xff]
    %v174 = vld [vmem:[#allocation5 + $0x1a0] sm:$0xff]
    %v175 = vld [vmem:[#allocation5 + $0x1a8] sm:$0xff]
    %v176 = vld [vmem:[#allocation5 + $0x1b0] sm:$0xff]
    %v177 = vld [vmem:[#allocation5 + $0x1b8] sm:$0xff]
    %v178 = vld [vmem:[#allocation5 + $0x1c0] sm:$0xff]
    %v179 = vld [vmem:[#allocation5 + $0x1c8] sm:$0xff]
    %v180 = vld [vmem:[#allocation5 + $0x1d0] sm:$0xff]
    %v181 = vld [vmem:[#allocation5 + $0x1d8] sm:$0xff]
    %v182 = vld [vmem:[#allocation5 + $0x1e0] sm:$0xff]
    %v183 = vld [vmem:[#allocation5 + $0x1e8] sm:$0xff]
    %v184 = vld [vmem:[#allocation5 + $0x1f0] sm:$0xff]
    %v185 = vld [vmem:[#allocation5 + $0x1f8] sm:$0xff]
    %v186 = vld [vmem:[#allocation5 + $0x200] sm:$0xff]
    %v187 = vld [vmem:[#allocation5 + $0x208] sm:$0xff]
    %v188 = vld [vmem:[#allocation5 + $0x210] sm:$0xff]
    %v189 = vld [vmem:[#allocation5 + $0x218] sm:$0xff]
    %v190 = vld [vmem:[#allocation5 + $0x220] sm:$0xff]
    %v191 = vld [vmem:[#allocation5 + $0x228] sm:$0xff]
    %v192 = vld [vmem:[#allocation5 + $0x230] sm:$0xff]
    %v193 = vld [vmem:[#allocation5 + $0x238] sm:$0xff]
    %v194 = vld [vmem:[#allocation5 + $0x240] sm:$0xff]
    %v195 = vld [vmem:[#allocation5 + $0x248] sm:$0xff]
    %v196 = vld [vmem:[#allocation5 + $0x250] sm:$0xff]
    %v197 = vld [vmem:[#allocation5 + $0x258] sm:$0xff]
    %v198 = vld [vmem:[#allocation5 + $0x260] sm:$0xff]
    %v199 = vld [vmem:[#allocation5 + $0x268] sm:$0xff]
    %v200 = vld [vmem:[#allocation5 + $0x270] sm:$0xff]
    %v201 = vld [vmem:[#allocation5 + $0x278] sm:$0xff]
    %v202 = vld [vmem:[#allocation5 + $0x280] sm:$0xff]
    %v203 = vld [vmem:[#allocation5 + $0x288] sm:$0xff]
    %v204 = vld [vmem:[#allocation5 + $0x290] sm:$0xff]
    %v205 = vld [vmem:[#allocation5 + $0x298] sm:$0xff]
    %v206 = vld [vmem:[#allocation5 + $0x2a0] sm:$0xff]
    %v207 = vld [vmem:[#allocation5 + $0x2a8] sm:$0xff]
    %v208 = vld [vmem:[#allocation5 + $0x2b0] sm:$0xff]
    %v209 = vld [vmem:[#allocation5 + $0x2b8] sm:$0xff]
    %v210 = vld [vmem:[#allocation5 + $0x2c0] sm:$0xff]
    %v211 = vld [vmem:[#allocation5 + $0x2c8] sm:$0xff]
    %v212 = vld [vmem:[#allocation5 + $0x2d0] sm:$0xff]
    %v213 = vld [vmem:[#allocation5 + $0x2d8] sm:$0xff]
    %v214 = vld [vmem:[#allocation5 + $0x2e0] sm:$0xff]
    %v215 = vld [vmem:[#allocation5 + $0x2e8] sm:$0xff]
    %v216 = vld [vmem:[#allocation5 + $0x2f0] sm:$0xff]
    %v217 = vld [vmem:[#allocation5 + $0x2f8] sm:$0xff]
    %v218 = vld [vmem:[#allocation5 + $0x300] sm:$0xff]
    %v219 = vld [vmem:[#allocation5 + $0x308] sm:$0xff]
    %v220 = vld [vmem:[#allocation5 + $0x310] sm:$0xff]
    %v221 = vld [vmem:[#allocation5 + $0x318] sm:$0xff]
    %v222 = vld [vmem:[#allocation5 + $0x320] sm:$0xff]
    %v223 = vld [vmem:[#allocation5 + $0x328] sm:$0xff]
    %v224 = vld [vmem:[#allocation5 + $0x330] sm:$0xff]
    %v225 = vld [vmem:[#allocation5 + $0x338] sm:$0xff]
    %v226 = vld [vmem:[#allocation5 + $0x340] sm:$0xff]
    %v227 = vld [vmem:[#allocation5 + $0x348] sm:$0xff]
    %v228 = vld [vmem:[#allocation5 + $0x350] sm:$0xff]
    %v229 = vld [vmem:[#allocation5 + $0x358] sm:$0xff]
    %v230 = vld [vmem:[#allocation5 + $0x360] sm:$0xff]
    %v231 = vld [vmem:[#allocation5 + $0x368] sm:$0xff]
    %v232 = vld [vmem:[#allocation5 + $0x370] sm:$0xff]
    %v233 = vld [vmem:[#allocation5 + $0x378] sm:$0xff]
    %v234 = vld [vmem:[#allocation5 + $0x380] sm:$0xff]
    %v235 = vld [vmem:[#allocation5 + $0x388] sm:$0xff]
    %v236 = vld [vmem:[#allocation5 + $0x390] sm:$0xff]
    %v237 = vld [vmem:[#allocation5 + $0x398] sm:$0xff]
    %v238 = vld [vmem:[#allocation5 + $0x3a0] sm:$0xff]
    %v239 = vld [vmem:[#allocation5 + $0x3a8] sm:$0xff]
    %v240 = vld [vmem:[#allocation5 + $0x3b0] sm:$0xff]
    %v241 = vld [vmem:[#allocation5 + $0x3b8] sm:$0xff]
    %v242 = vld [vmem:[#allocation5 + $0x3c0] sm:$0xff]
    %v243 = vld [vmem:[#allocation5 + $0x3c8] sm:$0xff]
    %v244 = vld [vmem:[#allocation5 + $0x3d0] sm:$0xff]
    %v245 = vld [vmem:[#allocation5 + $0x3d8] sm:$0xff]
    %v246 = vld [vmem:[#allocation5 + $0x3e0] sm:$0xff]
    %v247 = vld [vmem:[#allocation5 + $0x3e8] sm:$0xff]
    %v248 = vld [vmem:[#allocation5 + $0x3f0] sm:$0xff]
    %v249 = vld [vmem:[#allocation5 + $0x3f8] sm:$0xff]
    %v250 = vld [vmem:[#allocation5 + $0x400] sm:$0xff]
    %v251 = vld [vmem:[#allocation5 + $0x408] sm:$0xff]
    %v252 = vld [vmem:[#allocation5 + $0x410] sm:$0xff]
    %v253 = vld [vmem:[#allocation5 + $0x418] sm:$0xff]
    %v254 = vld [vmem:[#allocation5 + $0x420] sm:$0xff]
    %v255 = vld [vmem:[#allocation5 + $0x428] sm:$0xff]
    %v256 = vld [vmem:[#allocation5 + $0x430] sm:$0xff]
    %v257 = vld [vmem:[#allocation5 + $0x438] sm:$0xff]
    %v258 = vld [vmem:[#allocation5 + $0x440] sm:$0xff]
    %v259 = vld [vmem:[#allocation5 + $0x448] sm:$0xff]
    %v260 = vld [vmem:[#allocation5 + $0x450] sm:$0xff]
    %v261 = vld [vmem:[#allocation5 + $0x458] sm:$0xff]
    %v262 = vld [vmem:[#allocation5 + $0x460] sm:$0xff]
    %v263 = vld [vmem:[#allocation5 + $0x468] sm:$0xff]
    %v264 = vld [vmem:[#allocation5 + $0x470] sm:$0xff]
    %v265 = vld [vmem:[#allocation5 + $0x478] sm:$0xff]
    %v266 = vld [vmem:[#allocation5 + $0x480] sm:$0xff]
    %v267 = vld [vmem:[#allocation5 + $0x488] sm:$0xff]
    %v268 = vld [vmem:[#allocation5 + $0x490] sm:$0xff]
    %v269 = vld [vmem:[#allocation5 + $0x498] sm:$0xff]
    %v270 = vld [vmem:[#allocation5 + $0x4a0] sm:$0xff]
    %v271 = vld [vmem:[#allocation5 + $0x4a8] sm:$0xff]
    %v272 = vld [vmem:[#allocation5 + $0x4b0] sm:$0xff]
    %v273 = vld [vmem:[#allocation5 + $0x4b8] sm:$0xff]
    %v274 = vld [vmem:[#allocation5 + $0x4c0] sm:$0xff]
    %v275 = vld [vmem:[#allocation5 + $0x4c8] sm:$0xff]
    %v276 = vld [vmem:[#allocation5 + $0x4d0] sm:$0xff]
    %v277 = vld [vmem:[#allocation5 + $0x4d8] sm:$0xff]
    %v278 = vld [vmem:[#allocation5 + $0x4e0] sm:$0xff]
    %v279 = vld [vmem:[#allocation5 + $0x4e8] sm:$0xff]
    %v280 = vld [vmem:[#allocation5 + $0x4f0] sm:$0xff]
    %v281 = vld [vmem:[#allocation5 + $0x4f8] sm:$0xff]
    %v282 = vld [vmem:[#allocation5 + $0x500] sm:$0xff]
    %v283 = vld [vmem:[#allocation5 + $0x508] sm:$0xff]
    %v284 = vld [vmem:[#allocation5 + $0x510] sm:$0xff]
    %v285 = vld [vmem:[#allocation5 + $0x518] sm:$0xff]
    %v286 = vld [vmem:[#allocation5 + $0x520] sm:$0xff]
    %v287 = vld [vmem:[#allocation5 + $0x528] sm:$0xff]
    %v288 = vld [vmem:[#allocation5 + $0x530] sm:$0xff]
    %v289 = vld [vmem:[#allocation5 + $0x538] sm:$0xff]
    %v290 = vld [vmem:[#allocation5 + $0x540] sm:$0xff]
    %v291 = vld [vmem:[#allocation5 + $0x548] sm:$0xff]
    %v292 = vld [vmem:[#allocation5 + $0x550] sm:$0xff]
    %v293 = vld [vmem:[#allocation5 + $0x558] sm:$0xff]
    %v294 = vld [vmem:[#allocation5 + $0x560] sm:$0xff]
    %v295 = vld [vmem:[#allocation5 + $0x568] sm:$0xff]
    %v296 = vld [vmem:[#allocation5 + $0x570] sm:$0xff]
    %v297 = vld [vmem:[#allocation5 + $0x578] sm:$0xff]
    %v298 = vld [vmem:[#allocation5 + $0x580] sm:$0xff]
    %v299 = vld [vmem:[#allocation5 + $0x588] sm:$0xff]
    %v300 = vld [vmem:[#allocation5 + $0x590] sm:$0xff]
    %v301 = vld [vmem:[#allocation5 + $0x598] sm:$0xff]
    %v302 = vld [vmem:[#allocation5 + $0x5a0] sm:$0xff]
    %v303 = vld [vmem:[#allocation5 + $0x5a8] sm:$0xff]
    %v304 = vld [vmem:[#allocation5 + $0x5b0] sm:$0xff]
    %v305 = vld [vmem:[#allocation5 + $0x5b8] sm:$0xff]
    %v306 = vld [vmem:[#allocation5 + $0x5c0] sm:$0xff]
    %v307 = vld [vmem:[#allocation5 + $0x5c8] sm:$0xff]
    %v308 = vld [vmem:[#allocation5 + $0x5d0] sm:$0xff]
    %v309 = vld [vmem:[#allocation5 + $0x5d8] sm:$0xff]
    %v310 = vld [vmem:[#allocation5 + $0x5e0] sm:$0xff]
    %v311 = vld [vmem:[#allocation5 + $0x5e8] sm:$0xff]
    %v312 = vld [vmem:[#allocation5 + $0x5f0] sm:$0xff]
    %v313 = vld [vmem:[#allocation5 + $0x5f8] sm:$0xff]
    %v314 = vld [vmem:[#allocation5 + $0x600] sm:$0xff]
    %v315 = vld [vmem:[#allocation5 + $0x608] sm:$0xff]
    %v316 = vld [vmem:[#allocation5 + $0x610] sm:$0xff]
    %v317 = vld [vmem:[#allocation5 + $0x618] sm:$0xff]
    %v318 = vld [vmem:[#allocation5 + $0x620] sm:$0xff]
    %v319 = vld [vmem:[#allocation5 + $0x628] sm:$0xff]
    %v320 = vld [vmem:[#allocation5 + $0x630] sm:$0xff]
    %v321 = vld [vmem:[#allocation5 + $0x638] sm:$0xff]
    %v322 = vld [vmem:[#allocation5 + $0x640] sm:$0xff]
    %v323 = vld [vmem:[#allocation5 + $0x648] sm:$0xff]
    %v324 = vld [vmem:[#allocation5 + $0x650] sm:$0xff]
    %v325 = vld [vmem:[#allocation5 + $0x658] sm:$0xff]
    %v326 = vld [vmem:[#allocation5 + $0x660] sm:$0xff]
    %v327 = vld [vmem:[#allocation5 + $0x668] sm:$0xff]
    %v328 = vld [vmem:[#allocation5 + $0x670] sm:$0xff]
    %v329 = vld [vmem:[#allocation5 + $0x678] sm:$0xff]
    %v330 = vld [vmem:[#allocation5 + $0x680] sm:$0xff]
    %v331 = vld [vmem:[#allocation5 + $0x688] sm:$0xff]
    %v332 = vld [vmem:[#allocation5 + $0x690] sm:$0xff]
    %v333 = vld [vmem:[#allocation5 + $0x698] sm:$0xff]
    %v334 = vld [vmem:[#allocation5 + $0x6a0] sm:$0xff]
    %v335 = vld [vmem:[#allocation5 + $0x6a8] sm:$0xff]
    %v336 = vld [vmem:[#allocation5 + $0x6b0] sm:$0xff]
    %v337 = vld [vmem:[#allocation5 + $0x6b8] sm:$0xff]
    %v338 = vld [vmem:[#allocation5 + $0x6c0] sm:$0xff]
    %v339 = vld [vmem:[#allocation5 + $0x6c8] sm:$0xff]
    %v340 = vld [vmem:[#allocation5 + $0x6d0] sm:$0xff]
    %v341 = vld [vmem:[#allocation5 + $0x6d8] sm:$0xff]
    %v342 = vld [vmem:[#allocation5 + $0x6e0] sm:$0xff]
    %v343 = vld [vmem:[#allocation5 + $0x6e8] sm:$0xff]
    %v344 = vld [vmem:[#allocation5 + $0x6f0] sm:$0xff]
    %v345 = vld [vmem:[#allocation5 + $0x6f8] sm:$0xff]
    %v346 = vld [vmem:[#allocation5 + $0x700] sm:$0xff]
    %v347 = vld [vmem:[#allocation5 + $0x708] sm:$0xff]
    %v348 = vld [vmem:[#allocation5 + $0x710] sm:$0xff]
    %v349 = vld [vmem:[#allocation5 + $0x718] sm:$0xff]
    %v350 = vld [vmem:[#allocation5 + $0x720] sm:$0xff]
    %v351 = vld [vmem:[#allocation5 + $0x728] sm:$0xff]
    %v352 = vld [vmem:[#allocation5 + $0x730] sm:$0xff]
    %v353 = vld [vmem:[#allocation5 + $0x738] sm:$0xff]
    %v354 = vld [vmem:[#allocation5 + $0x740] sm:$0xff]
    %v355 = vld [vmem:[#allocation5 + $0x748] sm:$0xff]
    %v356 = vld [vmem:[#allocation5 + $0x750] sm:$0xff]
    %v357 = vld [vmem:[#allocation5 + $0x758] sm:$0xff]
    %v358 = vld [vmem:[#allocation5 + $0x760] sm:$0xff]
    %v359 = vld [vmem:[#allocation5 + $0x768] sm:$0xff]
    %v360 = vld [vmem:[#allocation5 + $0x770] sm:$0xff]
    %v361 = vld [vmem:[#allocation5 + $0x778] sm:$0xff]
    %v362 = vld [vmem:[#allocation5 + $0x780] sm:$0xff]
    %v363 = vld [vmem:[#allocation5 + $0x788] sm:$0xff]
    %v364 = vld [vmem:[#allocation5 + $0x790] sm:$0xff]
    %v365 = vld [vmem:[#allocation5 + $0x798] sm:$0xff]
    %v366 = vld [vmem:[#allocation5 + $0x7a0] sm:$0xff]
    %v367 = vld [vmem:[#allocation5 + $0x7a8] sm:$0xff]
    %v368 = vld [vmem:[#allocation5 + $0x7b0] sm:$0xff]
    %v369 = vld [vmem:[#allocation5 + $0x7b8] sm:$0xff]
    %v370 = vld [vmem:[#allocation5 + $0x7c0] sm:$0xff]
    %v371 = vld [vmem:[#allocation5 + $0x7c8] sm:$0xff]
    %v372 = vld [vmem:[#allocation5 + $0x7d0] sm:$0xff]
    %v373 = vld [vmem:[#allocation5 + $0x7d8] sm:$0xff]
    %v374 = vld [vmem:[#allocation5 + $0x7e0] sm:$0xff]
    %v375 = vld [vmem:[#allocation5 + $0x7e8] sm:$0xff]
    %v376 = vld [vmem:[#allocation5 + $0x7f0] sm:$0xff]
    %v377 = vld [vmem:[#allocation5 + $0x7f8] sm:$0xff]
    %v378 = vld [vmem:[#allocation5 + $0x800] sm:$0xff]
    %v379 = vld [vmem:[#allocation5 + $0x808] sm:$0xff]
    %v380 = vld [vmem:[#allocation5 + $0x810] sm:$0xff]
    %v381 = vld [vmem:[#allocation5 + $0x818] sm:$0xff]
    %v382 = vld [vmem:[#allocation5 + $0x820] sm:$0xff]
    %v383 = vld [vmem:[#allocation5 + $0x828] sm:$0xff]
    %v384 = vld [vmem:[#allocation5 + $0x830] sm:$0xff]
    %v385 = vld [vmem:[#allocation5 + $0x838] sm:$0xff]
    %v386 = vld [vmem:[#allocation5 + $0x840] sm:$0xff]
    %v387 = vld [vmem:[#allocation5 + $0x848] sm:$0xff]
    %v388 = vld [vmem:[#allocation5 + $0x850] sm:$0xff]
    %v389 = vld [vmem:[#allocation5 + $0x858] sm:$0xff]
    %v390 = vld [vmem:[#allocation5 + $0x860] sm:$0xff]
    %v391 = vld [vmem:[#allocation5 + $0x868] sm:$0xff]
    %v392 = vld [vmem:[#allocation5 + $0x870] sm:$0xff]
    %v393 = vld [vmem:[#allocation5 + $0x878] sm:$0xff]
    %v394 = vld [vmem:[#allocation5 + $0x880] sm:$0xff]
    %v395 = vld [vmem:[#allocation5 + $0x888] sm:$0xff]
    %v396 = vld [vmem:[#allocation5 + $0x890] sm:$0xff]
    %v397 = vld [vmem:[#allocation5 + $0x898] sm:$0xff]
    %v398 = vld [vmem:[#allocation5 + $0x8a0] sm:$0xff]
    %v399 = vld [vmem:[#allocation5 + $0x8a8] sm:$0xff]
    %v400 = vld [vmem:[#allocation5 + $0x8b0] sm:$0xff]
    %v401 = vld [vmem:[#allocation5 + $0x8b8] sm:$0xff]
    %v402 = vld [vmem:[#allocation5 + $0x8c0] sm:$0xff]
    %v403 = vld [vmem:[#allocation5 + $0x8c8] sm:$0xff]
    %v404 = vld [vmem:[#allocation5 + $0x8d0] sm:$0xff]
    %v405 = vld [vmem:[#allocation5 + $0x8d8] sm:$0xff]
    %v406 = vld [vmem:[#allocation5 + $0x8e0] sm:$0xff]
    %v407 = vld [vmem:[#allocation5 + $0x8e8] sm:$0xff]
    %v408 = vld [vmem:[#allocation5 + $0x8f0] sm:$0xff]
    %v409 = vld [vmem:[#allocation5 + $0x8f8] sm:$0xff]
    %v410 = vld [vmem:[#allocation5 + $0x900] sm:$0xff]
    %v411 = vld [vmem:[#allocation5 + $0x908] sm:$0xff]
    %v412 = vld [vmem:[#allocation5 + $0x910] sm:$0xff]
    %v413 = vld [vmem:[#allocation5 + $0x918] sm:$0xff]
    %v414 = vld [vmem:[#allocation5 + $0x920] sm:$0xff]
    %v415 = vld [vmem:[#allocation5 + $0x928] sm:$0xff]
    %v416 = vld [vmem:[#allocation5 + $0x930] sm:$0xff]
    %v417 = vld [vmem:[#allocation5 + $0x938] sm:$0xff]
    %v418 = vld [vmem:[#allocation5 + $0x940] sm:$0xff]
    %v419 = vld [vmem:[#allocation5 + $0x948] sm:$0xff]
    %v420 = vld [vmem:[#allocation5 + $0x950] sm:$0xff]
    %v421 = vld [vmem:[#allocation5 + $0x958] sm:$0xff]
    %v422 = vld [vmem:[#allocation5 + $0x960] sm:$0xff]
    %v423 = vld [vmem:[#allocation5 + $0x968] sm:$0xff]
    %v424 = vld [vmem:[#allocation5 + $0x970] sm:$0xff]
    %v425 = vld [vmem:[#allocation5 + $0x978] sm:$0xff]
    %v426 = vld [vmem:[#allocation5 + $0x980] sm:$0xff]
    %v427 = vld [vmem:[#allocation5 + $0x988] sm:$0xff]
    %v428 = vld [vmem:[#allocation5 + $0x990] sm:$0xff]
    %v429 = vld [vmem:[#allocation5 + $0x998] sm:$0xff]
    %v430 = vld [vmem:[#allocation5 + $0x9a0] sm:$0xff]
    %v431 = vld [vmem:[#allocation5 + $0x9a8] sm:$0xff]
    %v432 = vld [vmem:[#allocation5 + $0x9b0] sm:$0xff]
    %v433 = vld [vmem:[#allocation5 + $0x9b8] sm:$0xff]
    %v434 = vld [vmem:[#allocation5 + $0x9c0] sm:$0xff]
    %v435 = vld [vmem:[#allocation5 + $0x9c8] sm:$0xff]
    %v436 = vld [vmem:[#allocation5 + $0x9d0] sm:$0xff]
    %v437 = vld [vmem:[#allocation5 + $0x9d8] sm:$0xff]
    %v438 = vld [vmem:[#allocation5 + $0x9e0] sm:$0xff]
    %v439 = vld [vmem:[#allocation5 + $0x9e8] sm:$0xff]
    %v440 = vld [vmem:[#allocation5 + $0x9f0] sm:$0xff]
    %v441 = vld [vmem:[#allocation5 + $0x9f8] sm:$0xff]
    %v442 = vld [vmem:[#allocation5 + $0xa00] sm:$0xff]
    %v443 = vld [vmem:[#allocation5 + $0xa08] sm:$0xff]
    %v444 = vld [vmem:[#allocation5 + $0xa10] sm:$0xff]
    %v445 = vld [vmem:[#allocation5 + $0xa18] sm:$0xff]
    %v446 = vld [vmem:[#allocation5 + $0xa20] sm:$0xff]
    %v447 = vld [vmem:[#allocation5 + $0xa28] sm:$0xff]
    %v448 = vld [vmem:[#allocation5 + $0xa30] sm:$0xff]
    %v449 = vld [vmem:[#allocation5 + $0xa38] sm:$0xff]
    %v450 = vld [vmem:[#allocation5 + $0xa40] sm:$0xff]
    %v451 = vld [vmem:[#allocation5 + $0xa48] sm:$0xff]
    %v452 = vld [vmem:[#allocation5 + $0xa50] sm:$0xff]
    %v453 = vld [vmem:[#allocation5 + $0xa58] sm:$0xff]
    %v454 = vld [vmem:[#allocation5 + $0xa60] sm:$0xff]
    %v455 = vld [vmem:[#allocation5 + $0xa68] sm:$0xff]
    %v456 = vld [vmem:[#allocation5 + $0xa70] sm:$0xff]
    %v457 = vld [vmem:[#allocation5 + $0xa78] sm:$0xff]
    %v458 = vld [vmem:[#allocation5 + $0xa80] sm:$0xff]
    %v459 = vld [vmem:[#allocation5 + $0xa88] sm:$0xff]
    %v460 = vld [vmem:[#allocation5 + $0xa90] sm:$0xff]
    %v461 = vld [vmem:[#allocation5 + $0xa98] sm:$0xff]
    %v462 = vld [vmem:[#allocation5 + $0xaa0] sm:$0xff]
    %v463 = vld [vmem:[#allocation5 + $0xaa8] sm:$0xff]
    %v464 = vld [vmem:[#allocation5 + $0xab0] sm:$0xff]
    %v465 = vld [vmem:[#allocation5 + $0xab8] sm:$0xff]
    %v466 = vld [vmem:[#allocation5 + $0xac0] sm:$0xff]
    %v467 = vld [vmem:[#allocation5 + $0xac8] sm:$0xff]
    %v468 = vld [vmem:[#allocation5 + $0xad0] sm:$0xff]
    %v469 = vld [vmem:[#allocation5 + $0xad8] sm:$0xff]
    %v470 = vld [vmem:[#allocation5 + $0xae0] sm:$0xff]
    %v471 = vld [vmem:[#allocation5 + $0xae8] sm:$0xff]
    %v472 = vld [vmem:[#allocation5 + $0xaf0] sm:$0xff]
    %v473 = vld [vmem:[#allocation5 + $0xaf8] sm:$0xff]
    %v474 = vld [vmem:[#allocation5 + $0xb00] sm:$0xff]
    %v475 = vld [vmem:[#allocation5 + $0xb08] sm:$0xff]
    %v476 = vld [vmem:[#allocation5 + $0xb10] sm:$0xff]
    %v477 = vld [vmem:[#allocation5 + $0xb18] sm:$0xff]
    %v478 = vld [vmem:[#allocation5 + $0xb20] sm:$0xff]
    %v479 = vld [vmem:[#allocation5 + $0xb28] sm:$0xff]
    %v480 = vld [vmem:[#allocation5 + $0xb30] sm:$0xff]
    %v481 = vld [vmem:[#allocation5 + $0xb38] sm:$0xff]
    %v482 = vld [vmem:[#allocation5 + $0xb40] sm:$0xff]
    %v483 = vld [vmem:[#allocation5 + $0xb48] sm:$0xff]
    %v484 = vld [vmem:[#allocation5 + $0xb50] sm:$0xff]
    %v485 = vld [vmem:[#allocation5 + $0xb58] sm:$0xff]
    %v486 = vld [vmem:[#allocation5 + $0xb60] sm:$0xff]
    %v487 = vld [vmem:[#allocation5 + $0xb68] sm:$0xff]
    %v488 = vld [vmem:[#allocation5 + $0xb70] sm:$0xff]
    %v489 = vld [vmem:[#allocation5 + $0xb78] sm:$0xff]
    %v490 = vld [vmem:[#allocation5 + $0xb80] sm:$0xff]
    %v491 = vld [vmem:[#allocation5 + $0xb88] sm:$0xff]
    %v492 = vld [vmem:[#allocation5 + $0xb90] sm:$0xff]
    %v493 = vld [vmem:[#allocation5 + $0xb98] sm:$0xff]
    %v494 = vld [vmem:[#allocation5 + $0xba0] sm:$0xff]
    %v495 = vld [vmem:[#allocation5 + $0xba8] sm:$0xff]
    %v496 = vld [vmem:[#allocation5 + $0xbb0] sm:$0xff]
    %v497 = vld [vmem:[#allocation5 + $0xbb8] sm:$0xff]
    %v498 = vld [vmem:[#allocation5 + $0xbc0] sm:$0xff]
    %v499 = vld [vmem:[#allocation5 + $0xbc8] sm:$0xff]
    %v500 = vld [vmem:[#allocation5 + $0xbd0] sm:$0xff]
    %v501 = vld [vmem:[#allocation5 + $0xbd8] sm:$0xff]
    %v502 = vld [vmem:[#allocation5 + $0xbe0] sm:$0xff]
    %v503 = vld [vmem:[#allocation5 + $0xbe8] sm:$0xff]
    %v504 = vld [vmem:[#allocation5 + $0xbf0] sm:$0xff]
    %v505 = vld [vmem:[#allocation5 + $0xbf8] sm:$0xff]
    %v506 = vld [vmem:[#allocation5 + $0xc00] sm:$0xff]
    %v507 = vld [vmem:[#allocation5 + $0xc08] sm:$0xff]
    %v508 = vld [vmem:[#allocation5 + $0xc10] sm:$0xff]
    %v509 = vld [vmem:[#allocation5 + $0xc18] sm:$0xff]
    %v510 = vld [vmem:[#allocation5 + $0xc20] sm:$0xff]
    %v511 = vld [vmem:[#allocation5 + $0xc28] sm:$0xff]
    %v512 = vld [vmem:[#allocation5 + $0xc30] sm:$0xff]
    %v513 = vld [vmem:[#allocation5 + $0xc38] sm:$0xff]
    %v514 = vld [vmem:[#allocation5 + $0xc40] sm:$0xff]
    %v515 = vld [vmem:[#allocation5 + $0xc48] sm:$0xff]
    %v516 = vld [vmem:[#allocation5 + $0xc50] sm:$0xff]
    %v517 = vld [vmem:[#allocation5 + $0xc58] sm:$0xff]
    %v518 = vld [vmem:[#allocation5 + $0xc60] sm:$0xff]
    %v519 = vld [vmem:[#allocation5 + $0xc68] sm:$0xff]
    %v520 = vld [vmem:[#allocation5 + $0xc70] sm:$0xff]
    %v521 = vld [vmem:[#allocation5 + $0xc78] sm:$0xff]
    %v522 = vld [vmem:[#allocation5 + $0xc80] sm:$0xff]
    %v523 = vld [vmem:[#allocation5 + $0xc88] sm:$0xff]
    %v524 = vld [vmem:[#allocation5 + $0xc90] sm:$0xff]
    %v525 = vld [vmem:[#allocation5 + $0xc98] sm:$0xff]
    %v526 = vld [vmem:[#allocation5 + $0xca0] sm:$0xff]
    %v527 = vld [vmem:[#allocation5 + $0xca8] sm:$0xff]
    %v528 = vld [vmem:[#allocation5 + $0xcb0] sm:$0xff]
    %v529 = vld [vmem:[#allocation5 + $0xcb8] sm:$0xff]
    %v530 = vld [vmem:[#allocation5 + $0xcc0] sm:$0xff]
    %v531 = vld [vmem:[#allocation5 + $0xcc8] sm:$0xff]
    %v532 = vld [vmem:[#allocation5 + $0xcd0] sm:$0xff]
    %v533 = vld [vmem:[#allocation5 + $0xcd8] sm:$0xff]
    %v534 = vld [vmem:[#allocation5 + $0xce0] sm:$0xff]
    %v535 = vld [vmem:[#allocation5 + $0xce8] sm:$0xff]
    %v536 = vld [vmem:[#allocation5 + $0xcf0] sm:$0xff]
    %v537 = vld [vmem:[#allocation5 + $0xcf8] sm:$0xff]
    %v538 = vld [vmem:[#allocation5 + $0xd00] sm:$0xff]
    %v539 = vld [vmem:[#allocation5 + $0xd08] sm:$0xff]
    %v540 = vld [vmem:[#allocation5 + $0xd10] sm:$0xff]
    %v541 = vld [vmem:[#allocation5 + $0xd18] sm:$0xff]
    %v542 = vld [vmem:[#allocation5 + $0xd20] sm:$0xff]
    %v543 = vld [vmem:[#allocation5 + $0xd28] sm:$0xff]
    %v544 = vld [vmem:[#allocation5 + $0xd30] sm:$0xff]
    %v545 = vld [vmem:[#allocation5 + $0xd38] sm:$0xff]
    %v546 = vld [vmem:[#allocation5 + $0xd40] sm:$0xff]
    %v547 = vld [vmem:[#allocation5 + $0xd48] sm:$0xff]
    %v548 = vld [vmem:[#allocation5 + $0xd50] sm:$0xff]
    %v549 = vld [vmem:[#allocation5 + $0xd58] sm:$0xff]
    %v550 = vld [vmem:[#allocation5 + $0xd60] sm:$0xff]
    %v551 = vld [vmem:[#allocation5 + $0xd68] sm:$0xff]
    %v552 = vld [vmem:[#allocation5 + $0xd70] sm:$0xff]
    %v553 = vld [vmem:[#allocation5 + $0xd78] sm:$0xff]
    %v554 = vld [vmem:[#allocation5 + $0xd80] sm:$0xff]
    %v555 = vld [vmem:[#allocation5 + $0xd88] sm:$0xff]
    %v556 = vld [vmem:[#allocation5 + $0xd90] sm:$0xff]
    %v557 = vld [vmem:[#allocation5 + $0xd98] sm:$0xff]
    %v558 = vld [vmem:[#allocation5 + $0xda0] sm:$0xff]
    %v559 = vld [vmem:[#allocation5 + $0xda8] sm:$0xff]
    %v560 = vld [vmem:[#allocation5 + $0xdb0] sm:$0xff]
    %v561 = vld [vmem:[#allocation5 + $0xdb8] sm:$0xff]
    %v562 = vld [vmem:[#allocation5 + $0xdc0] sm:$0xff]
    %v563 = vld [vmem:[#allocation5 + $0xdc8] sm:$0xff]
    %v564 = vld [vmem:[#allocation5 + $0xdd0] sm:$0xff]
    %v565 = vld [vmem:[#allocation5 + $0xdd8] sm:$0xff]
    %v566 = vld [vmem:[#allocation5 + $0xde0] sm:$0xff]
    %v567 = vld [vmem:[#allocation5 + $0xde8] sm:$0xff]
    %v568 = vld [vmem:[#allocation5 + $0xdf0] sm:$0xff]
    %v569 = vld [vmem:[#allocation5 + $0xdf8] sm:$0xff]
    %v570 = vld [vmem:[#allocation5 + $0xe00] sm:$0xff]
    %v571 = vld [vmem:[#allocation5 + $0xe08] sm:$0xff]
    %v572 = vld [vmem:[#allocation5 + $0xe10] sm:$0xff]
    %v573 = vld [vmem:[#allocation5 + $0xe18] sm:$0xff]
    %v574 = vld [vmem:[#allocation5 + $0xe20] sm:$0xff]
    %v575 = vld [vmem:[#allocation5 + $0xe28] sm:$0xff]
    %v576 = vld [vmem:[#allocation5 + $0xe30] sm:$0xff]
    %v577 = vld [vmem:[#allocation5 + $0xe38] sm:$0xff]
    %v578 = vld [vmem:[#allocation5 + $0xe40] sm:$0xff]
    %v579 = vld [vmem:[#allocation5 + $0xe48] sm:$0xff]
    %v580 = vld [vmem:[#allocation5 + $0xe50] sm:$0xff]
    %v581 = vld [vmem:[#allocation5 + $0xe58] sm:$0xff]
    %v582 = vld [vmem:[#allocation5 + $0xe60] sm:$0xff]
    %v583 = vld [vmem:[#allocation5 + $0xe68] sm:$0xff]
    %v584 = vld [vmem:[#allocation5 + $0xe70] sm:$0xff]
    %v585 = vld [vmem:[#allocation5 + $0xe78] sm:$0xff]
    %v586 = vld [vmem:[#allocation5 + $0xe80] sm:$0xff]
    %v587 = vld [vmem:[#allocation5 + $0xe88] sm:$0xff]
    %v588 = vld [vmem:[#allocation5 + $0xe90] sm:$0xff]
    %v589 = vld [vmem:[#allocation5 + $0xe98] sm:$0xff]
    %v590 = vld [vmem:[#allocation5 + $0xea0] sm:$0xff]
    %v591 = vld [vmem:[#allocation5 + $0xea8] sm:$0xff]
    %v592 = vld [vmem:[#allocation5 + $0xeb0] sm:$0xff]
    %v593 = vld [vmem:[#allocation5 + $0xeb8] sm:$0xff]
    %v594 = vld [vmem:[#allocation5 + $0xec0] sm:$0xff]
    %v595 = vld [vmem:[#allocation5 + $0xec8] sm:$0xff]
    %v596 = vld [vmem:[#allocation5 + $0xed0] sm:$0xff]
    %v597 = vld [vmem:[#allocation5 + $0xed8] sm:$0xff]
    %v598 = vld [vmem:[#allocation5 + $0xee0] sm:$0xff]
    %v599 = vld [vmem:[#allocation5 + $0xee8] sm:$0xff]
    %v600 = vld [vmem:[#allocation5 + $0xef0] sm:$0xff]
    %v601 = vld [vmem:[#allocation5 + $0xef8] sm:$0xff]
    %v602 = vld [vmem:[#allocation5 + $0xf00] sm:$0xff]
    %v603 = vld [vmem:[#allocation5 + $0xf08] sm:$0xff]
    %v604 = vld [vmem:[#allocation5 + $0xf10] sm:$0xff]
    %v605 = vld [vmem:[#allocation5 + $0xf18] sm:$0xff]
    %v606 = vld [vmem:[#allocation5 + $0xf20] sm:$0xff]
    %v607 = vld [vmem:[#allocation5 + $0xf28] sm:$0xff]
    %v608 = vld [vmem:[#allocation5 + $0xf30] sm:$0xff]
    %v609 = vld [vmem:[#allocation5 + $0xf38] sm:$0xff]
    %v610 = vld [vmem:[#allocation5 + $0xf40] sm:$0xff]
    %v611 = vld [vmem:[#allocation5 + $0xf48] sm:$0xff]
    %v612 = vld [vmem:[#allocation5 + $0xf50] sm:$0xff]
    %v613 = vld [vmem:[#allocation5 + $0xf58] sm:$0xff]
    %v614 = vld [vmem:[#allocation5 + $0xf60] sm:$0xff]
    %v615 = vld [vmem:[#allocation5 + $0xf68] sm:$0xff]
    %v616 = vld [vmem:[#allocation5 + $0xf70] sm:$0xff]
    %v617 = vld [vmem:[#allocation5 + $0xf78] sm:$0xff]
    %v618 = vld [vmem:[#allocation5 + $0xf80] sm:$0xff]
    %v619 = vld [vmem:[#allocation5 + $0xf88] sm:$0xff]
    %v620 = vld [vmem:[#allocation5 + $0xf90] sm:$0xff]
    %v621 = vld [vmem:[#allocation5 + $0xf98] sm:$0xff]
    %v622 = vld [vmem:[#allocation5 + $0xfa0] sm:$0xff]
    %v623 = vld [vmem:[#allocation5 + $0xfa8] sm:$0xff]
    %v624 = vld [vmem:[#allocation5 + $0xfb0] sm:$0xff]
    %v625 = vld [vmem:[#allocation5 + $0xfb8] sm:$0xff]
    %v626 = vld [vmem:[#allocation5 + $0xfc0] sm:$0xff]
    %v627 = vld [vmem:[#allocation5 + $0xfc8] sm:$0xff]
    %v628 = vld [vmem:[#allocation5 + $0xfd0] sm:$0xff]
    %v629 = vld [vmem:[#allocation5 + $0xfd8] sm:$0xff]
    %v630 = vld [vmem:[#allocation5 + $0xfe0] sm:$0xff]
    %v631 = vld [vmem:[#allocation5 + $0xfe8] sm:$0xff]
    %v632 = vld [vmem:[#allocation5 + $0xff0] sm:$0xff]
    %v633 = vld [vmem:[#allocation5 + $0xff8] sm:$0xff]
    %v634 = vld [vmem:[#allocation7] sm:$0xf]
    %v636 = vperm.slane %v634, 0
    %v637 = vperm.slane %v634, 1
    %v638 = vperm.slane %v634, 2
    %v639 = vperm.slane %v634, 3
    %644 = vmatpush.msra.mxu0 %v182
    %645 = vmatpush.msra.mxu0 %v178
    %646 = vmatpush.msra.mxu0 %v174
    %647 = vmatpush.msra.mxu0 %v170
    %648 = vmatpush.msra.mxu0 %v166
    %649 = vmatpush.msra.mxu0 %v162
    %650 = vmatpush.msra.mxu0 %v158
    %651 = vmatpush.msra.mxu0 %v154
    %652 = vmatpush.msra.mxu0 %v150
    %653 = vmatpush.msra.mxu0 %v146
    %654 = vmatpush.msra.mxu0 %v142
    %655 = vmatpush.msra.mxu0 %v138
    %656 = vmatpush.msra.mxu0 %v134
    %657 = vmatpush.msra.mxu0 %v130
    %658 = vmatpush.msra.mxu0 %v126
    %659 = vmatpush.msra.mxu0 %v122
    %660 = vmatmul.f32.gmra.mxu0 %v114
    %v661 = vpop.f32.mrf.mxu0
    %v662 = vadd.f32 %v636, %v661
    %663 = vdwg.mxu0
    %664 = vmatpush.msra.mxu0 %v246
    %665 = vmatpush.msra.mxu0 %v242
    %666 = vmatpush.msra.mxu0 %v238
    %667 = vmatpush.msra.mxu0 %v234
    %668 = vmatpush.msra.mxu0 %v230
    %669 = vmatpush.msra.mxu0 %v226
    %670 = vmatpush.msra.mxu0 %v222
    %671 = vmatpush.msra.mxu0 %v218
    %672 = vmatpush.msra.mxu0 %v214
    %673 = vmatpush.msra.mxu0 %v210
    %674 = vmatpush.msra.mxu0 %v206
    %675 = vmatpush.msra.mxu0 %v202
    %676 = vmatpush.msra.mxu0 %v198
    %677 = vmatpush.msra.mxu0 %v194
    %678 = vmatpush.msra.mxu0 %v190
    %679 = vmatpush.msra.mxu0 %v186
    %680 = vmatmul.f32.gmra.mxu0 %v115
    %v681 = vpop.f32.mrf.mxu0
    %v682 = vadd.f32 %v662, %v681
    %683 = vdwg.mxu0
    %684 = vmatpush.msra.mxu0 %v310
    %685 = vmatpush.msra.mxu0 %v306
    %686 = vmatpush.msra.mxu0 %v302
    %687 = vmatpush.msra.mxu0 %v298
    %688 = vmatpush.msra.mxu0 %v294
    %689 = vmatpush.msra.mxu0 %v290
    %690 = vmatpush.msra.mxu0 %v286
    %691 = vmatpush.msra.mxu0 %v282
    %692 = vmatpush.msra.mxu0 %v278
    %693 = vmatpush.msra.mxu0 %v274
    %694 = vmatpush.msra.mxu0 %v270
    %695 = vmatpush.msra.mxu0 %v266
    %696 = vmatpush.msra.mxu0 %v262
    %697 = vmatpush.msra.mxu0 %v258
    %698 = vmatpush.msra.mxu0 %v254
    %699 = vmatpush.msra.mxu0 %v250
    %700 = vmatmul.f32.gmra.mxu0 %v116
    %v701 = vpop.f32.mrf.mxu0
    %v702 = vadd.f32 %v682, %v701
    %703 = vdwg.mxu0
    %704 = vmatpush.msra.mxu0 %v374
    %705 = vmatpush.msra.mxu0 %v370
    %706 = vmatpush.msra.mxu0 %v366
    %707 = vmatpush.msra.mxu0 %v362
    %708 = vmatpush.msra.mxu0 %v358
    %709 = vmatpush.msra.mxu0 %v354
    %710 = vmatpush.msra.mxu0 %v350
    %711 = vmatpush.msra.mxu0 %v346
    %712 = vmatpush.msra.mxu0 %v342
    %713 = vmatpush.msra.mxu0 %v338
    %714 = vmatpush.msra.mxu0 %v334
    %715 = vmatpush.msra.mxu0 %v330
    %716 = vmatpush.msra.mxu0 %v326
    %717 = vmatpush.msra.mxu0 %v322
    %718 = vmatpush.msra.mxu0 %v318
    %719 = vmatpush.msra.mxu0 %v314
    %720 = vmatmul.f32.gmra.mxu0 %v117
    %v721 = vpop.f32.mrf.mxu0
    %v722 = vadd.f32 %v702, %v721
    %723 = vdwg.mxu0
    %724 = vmatpush.msra.mxu0 %v438
    %725 = vmatpush.msra.mxu0 %v434
    %726 = vmatpush.msra.mxu0 %v430
    %727 = vmatpush.msra.mxu0 %v426
    %728 = vmatpush.msra.mxu0 %v422
    %729 = vmatpush.msra.mxu0 %v418
    %730 = vmatpush.msra.mxu0 %v414
    %731 = vmatpush.msra.mxu0 %v410
    %732 = vmatpush.msra.mxu0 %v406
    %733 = vmatpush.msra.mxu0 %v402
    %734 = vmatpush.msra.mxu0 %v398
    %735 = vmatpush.msra.mxu0 %v394
    %736 = vmatpush.msra.mxu0 %v390
    %737 = vmatpush.msra.mxu0 %v386
    %738 = vmatpush.msra.mxu0 %v382
    %739 = vmatpush.msra.mxu0 %v378
    %740 = vmatmul.f32.gmra.mxu0 %v118
    %v741 = vpop.f32.mrf.mxu0
    %v742 = vadd.f32 %v722, %v741
    %743 = vdwg.mxu0
    %744 = vmatpush.msra.mxu0 %v502
    %745 = vmatpush.msra.mxu0 %v498
    %746 = vmatpush.msra.mxu0 %v494
    %747 = vmatpush.msra.mxu0 %v490
    %748 = vmatpush.msra.mxu0 %v486
    %749 = vmatpush.msra.mxu0 %v482
    %750 = vmatpush.msra.mxu0 %v478
    %751 = vmatpush.msra.mxu0 %v474
    %752 = vmatpush.msra.mxu0 %v470
    %753 = vmatpush.msra.mxu0 %v466
    %754 = vmatpush.msra.mxu0 %v462
    %755 = vmatpush.msra.mxu0 %v458
    %756 = vmatpush.msra.mxu0 %v454
    %757 = vmatpush.msra.mxu0 %v450
    %758 = vmatpush.msra.mxu0 %v446
    %759 = vmatpush.msra.mxu0 %v442
    %760 = vmatmul.f32.gmra.mxu0 %v119
    %v761 = vpop.f32.mrf.mxu0
    %v762 = vadd.f32 %v742, %v761
    %763 = vdwg.mxu0
    %764 = vmatpush.msra.mxu0 %v566
    %765 = vmatpush.msra.mxu0 %v562
    %766 = vmatpush.msra.mxu0 %v558
    %767 = vmatpush.msra.mxu0 %v554
    %768 = vmatpush.msra.mxu0 %v550
    %769 = vmatpush.msra.mxu0 %v546
    %770 = vmatpush.msra.mxu0 %v542
    %771 = vmatpush.msra.mxu0 %v538
    %772 = vmatpush.msra.mxu0 %v534
    %773 = vmatpush.msra.mxu0 %v530
    %774 = vmatpush.msra.mxu0 %v526
    %775 = vmatpush.msra.mxu0 %v522
    %776 = vmatpush.msra.mxu0 %v518
    %777 = vmatpush.msra.mxu0 %v514
    %778 = vmatpush.msra.mxu0 %v510
    %779 = vmatpush.msra.mxu0 %v506
    %780 = vmatmul.f32.gmra.mxu0 %v120
    %v781 = vpop.f32.mrf.mxu0
    %v782 = vadd.f32 %v762, %v781
    %783 = vdwg.mxu0
    %784 = vmatpush.msra.mxu0 %v630
    %785 = vmatpush.msra.mxu0 %v626
    %786 = vmatpush.msra.mxu0 %v622
    %787 = vmatpush.msra.mxu0 %v618
    %788 = vmatpush.msra.mxu0 %v614
    %789 = vmatpush.msra.mxu0 %v610
    %790 = vmatpush.msra.mxu0 %v606
    %791 = vmatpush.msra.mxu0 %v602
    %792 = vmatpush.msra.mxu0 %v598
    %793 = vmatpush.msra.mxu0 %v594
    %794 = vmatpush.msra.mxu0 %v590
    %795 = vmatpush.msra.mxu0 %v586
    %796 = vmatpush.msra.mxu0 %v582
    %797 = vmatpush.msra.mxu0 %v578
    %798 = vmatpush.msra.mxu0 %v574
    %799 = vmatpush.msra.mxu0 %v570
    %800 = vmatmul.f32.gmra.mxu0 %v121
    %v801 = vpop.f32.mrf.mxu0
    %v802 = vadd.f32 %v782, %v801
    %803 = vdwg.mxu0
    %804 = vmatpush.msra.mxu0 %v183
    %805 = vmatpush.msra.mxu0 %v179
    %806 = vmatpush.msra.mxu0 %v175
    %807 = vmatpush.msra.mxu0 %v171
    %808 = vmatpush.msra.mxu0 %v167
    %809 = vmatpush.msra.mxu0 %v163
    %810 = vmatpush.msra.mxu0 %v159
    %811 = vmatpush.msra.mxu0 %v155
    %812 = vmatpush.msra.mxu0 %v151
    %813 = vmatpush.msra.mxu0 %v147
    %814 = vmatpush.msra.mxu0 %v143
    %815 = vmatpush.msra.mxu0 %v139
    %816 = vmatpush.msra.mxu0 %v135
    %817 = vmatpush.msra.mxu0 %v131
    %818 = vmatpush.msra.mxu0 %v127
    %819 = vmatpush.msra.mxu0 %v123
    %820 = vmatmul.f32.gmra.mxu0 %v114
    %v821 = vpop.f32.mrf.mxu0
    %v822 = vadd.f32 %v637, %v821
    %823 = vdwg.mxu0
    %824 = vmatpush.msra.mxu0 %v247
    %825 = vmatpush.msra.mxu0 %v243
    %826 = vmatpush.msra.mxu0 %v239
    %827 = vmatpush.msra.mxu0 %v235
    %828 = vmatpush.msra.mxu0 %v231
    %829 = vmatpush.msra.mxu0 %v227
    %830 = vmatpush.msra.mxu0 %v223
    %831 = vmatpush.msra.mxu0 %v219
    %832 = vmatpush.msra.mxu0 %v215
    %833 = vmatpush.msra.mxu0 %v211
    %834 = vmatpush.msra.mxu0 %v207
    %835 = vmatpush.msra.mxu0 %v203
    %836 = vmatpush.msra.mxu0 %v199
    %837 = vmatpush.msra.mxu0 %v195
    %838 = vmatpush.msra.mxu0 %v191
    %839 = vmatpush.msra.mxu0 %v187
    %840 = vmatmul.f32.gmra.mxu0 %v115
    %v841 = vpop.f32.mrf.mxu0
    %v842 = vadd.f32 %v822, %v841
    %843 = vdwg.mxu0
    %844 = vmatpush.msra.mxu0 %v311
    %845 = vmatpush.msra.mxu0 %v307
    %846 = vmatpush.msra.mxu0 %v303
    %847 = vmatpush.msra.mxu0 %v299
    %848 = vmatpush.msra.mxu0 %v295
    %849 = vmatpush.msra.mxu0 %v291
    %850 = vmatpush.msra.mxu0 %v287
    %851 = vmatpush.msra.mxu0 %v283
    %852 = vmatpush.msra.mxu0 %v279
    %853 = vmatpush.msra.mxu0 %v275
    %854 = vmatpush.msra.mxu0 %v271
    %855 = vmatpush.msra.mxu0 %v267
    %856 = vmatpush.msra.mxu0 %v263
    %857 = vmatpush.msra.mxu0 %v259
    %858 = vmatpush.msra.mxu0 %v255
    %859 = vmatpush.msra.mxu0 %v251
    %860 = vmatmul.f32.gmra.mxu0 %v116
    %v861 = vpop.f32.mrf.mxu0
    %v862 = vadd.f32 %v842, %v861
    %863 = vdwg.mxu0
    %864 = vmatpush.msra.mxu0 %v375
    %865 = vmatpush.msra.mxu0 %v371
    %866 = vmatpush.msra.mxu0 %v367
    %867 = vmatpush.msra.mxu0 %v363
    %868 = vmatpush.msra.mxu0 %v359
    %869 = vmatpush.msra.mxu0 %v355
    %870 = vmatpush.msra.mxu0 %v351
    %871 = vmatpush.msra.mxu0 %v347
    %872 = vmatpush.msra.mxu0 %v343
    %873 = vmatpush.msra.mxu0 %v339
    %874 = vmatpush.msra.mxu0 %v335
    %875 = vmatpush.msra.mxu0 %v331
    %876 = vmatpush.msra.mxu0 %v327
    %877 = vmatpush.msra.mxu0 %v323
    %878 = vmatpush.msra.mxu0 %v319
    %879 = vmatpush.msra.mxu0 %v315
    %880 = vmatmul.f32.gmra.mxu0 %v117
    %v881 = vpop.f32.mrf.mxu0
    %v882 = vadd.f32 %v862, %v881
    %883 = vdwg.mxu0
    %884 = vmatpush.msra.mxu0 %v439
    %885 = vmatpush.msra.mxu0 %v435
    %886 = vmatpush.msra.mxu0 %v431
    %887 = vmatpush.msra.mxu0 %v427
    %888 = vmatpush.msra.mxu0 %v423
    %889 = vmatpush.msra.mxu0 %v419
    %890 = vmatpush.msra.mxu0 %v415
    %891 = vmatpush.msra.mxu0 %v411
    %892 = vmatpush.msra.mxu0 %v407
    %893 = vmatpush.msra.mxu0 %v403
    %894 = vmatpush.msra.mxu0 %v399
    %895 = vmatpush.msra.mxu0 %v395
    %896 = vmatpush.msra.mxu0 %v391
    %897 = vmatpush.msra.mxu0 %v387
    %898 = vmatpush.msra.mxu0 %v383
    %899 = vmatpush.msra.mxu0 %v379
    %900 = vmatmul.f32.gmra.mxu0 %v118
    %v901 = vpop.f32.mrf.mxu0
    %v902 = vadd.f32 %v882, %v901
    %903 = vdwg.mxu0
    %904 = vmatpush.msra.mxu0 %v503
    %905 = vmatpush.msra.mxu0 %v499
    %906 = vmatpush.msra.mxu0 %v495
    %907 = vmatpush.msra.mxu0 %v491
    %908 = vmatpush.msra.mxu0 %v487
    %909 = vmatpush.msra.mxu0 %v483
    %910 = vmatpush.msra.mxu0 %v479
    %911 = vmatpush.msra.mxu0 %v475
    %912 = vmatpush.msra.mxu0 %v471
    %913 = vmatpush.msra.mxu0 %v467
    %914 = vmatpush.msra.mxu0 %v463
    %915 = vmatpush.msra.mxu0 %v459
    %916 = vmatpush.msra.mxu0 %v455
    %917 = vmatpush.msra.mxu0 %v451
    %918 = vmatpush.msra.mxu0 %v447
    %919 = vmatpush.msra.mxu0 %v443
    %920 = vmatmul.f32.gmra.mxu0 %v119
    %v921 = vpop.f32.mrf.mxu0
    %v922 = vadd.f32 %v902, %v921
    %923 = vdwg.mxu0
    %924 = vmatpush.msra.mxu0 %v567
    %925 = vmatpush.msra.mxu0 %v563
    %926 = vmatpush.msra.mxu0 %v559
    %927 = vmatpush.msra.mxu0 %v555
    %928 = vmatpush.msra.mxu0 %v551
    %929 = vmatpush.msra.mxu0 %v547
    %930 = vmatpush.msra.mxu0 %v543
    %931 = vmatpush.msra.mxu0 %v539
    %932 = vmatpush.msra.mxu0 %v535
    %933 = vmatpush.msra.mxu0 %v531
    %934 = vmatpush.msra.mxu0 %v527
    %935 = vmatpush.msra.mxu0 %v523
    %936 = vmatpush.msra.mxu0 %v519
    %937 = vmatpush.msra.mxu0 %v515
    %938 = vmatpush.msra.mxu0 %v511
    %939 = vmatpush.msra.mxu0 %v507
    %940 = vmatmul.f32.gmra.mxu0 %v120
    %v941 = vpop.f32.mrf.mxu0
    %v942 = vadd.f32 %v922, %v941
    %943 = vdwg.mxu0
    %944 = vmatpush.msra.mxu0 %v631
    %945 = vmatpush.msra.mxu0 %v627
    %946 = vmatpush.msra.mxu0 %v623
    %947 = vmatpush.msra.mxu0 %v619
    %948 = vmatpush.msra.mxu0 %v615
    %949 = vmatpush.msra.mxu0 %v611
    %950 = vmatpush.msra.mxu0 %v607
    %951 = vmatpush.msra.mxu0 %v603
    %952 = vmatpush.msra.mxu0 %v599
    %953 = vmatpush.msra.mxu0 %v595
    %954 = vmatpush.msra.mxu0 %v591
    %955 = vmatpush.msra.mxu0 %v587
    %956 = vmatpush.msra.mxu0 %v583
    %957 = vmatpush.msra.mxu0 %v579
    %958 = vmatpush.msra.mxu0 %v575
    %959 = vmatpush.msra.mxu0 %v571
    %960 = vmatmul.f32.gmra.mxu0 %v121
    %v961 = vpop.f32.mrf.mxu0
    %v962 = vadd.f32 %v942, %v961
    %963 = vdwg.mxu0
    %964 = vmatpush.msra.mxu0 %v184
    %965 = vmatpush.msra.mxu0 %v180
    %966 = vmatpush.msra.mxu0 %v176
    %967 = vmatpush.msra.mxu0 %v172
    %968 = vmatpush.msra.mxu0 %v168
    %969 = vmatpush.msra.mxu0 %v164
    %970 = vmatpush.msra.mxu0 %v160
    %971 = vmatpush.msra.mxu0 %v156
    %972 = vmatpush.msra.mxu0 %v152
    %973 = vmatpush.msra.mxu0 %v148
    %974 = vmatpush.msra.mxu0 %v144
    %975 = vmatpush.msra.mxu0 %v140
    %976 = vmatpush.msra.mxu0 %v136
    %977 = vmatpush.msra.mxu0 %v132
    %978 = vmatpush.msra.mxu0 %v128
    %979 = vmatpush.msra.mxu0 %v124
    %980 = vmatmul.f32.gmra.mxu0 %v114
    %v981 = vpop.f32.mrf.mxu0
    %v982 = vadd.f32 %v638, %v981
    %983 = vdwg.mxu0
    %984 = vmatpush.msra.mxu0 %v248
    %985 = vmatpush.msra.mxu0 %v244
    %986 = vmatpush.msra.mxu0 %v240
    %987 = vmatpush.msra.mxu0 %v236
    %988 = vmatpush.msra.mxu0 %v232
    %989 = vmatpush.msra.mxu0 %v228
    %990 = vmatpush.msra.mxu0 %v224
    %991 = vmatpush.msra.mxu0 %v220
    %992 = vmatpush.msra.mxu0 %v216
    %993 = vmatpush.msra.mxu0 %v212
    %994 = vmatpush.msra.mxu0 %v208
    %995 = vmatpush.msra.mxu0 %v204
    %996 = vmatpush.msra.mxu0 %v200
    %997 = vmatpush.msra.mxu0 %v196
    %998 = vmatpush.msra.mxu0 %v192
    %999 = vmatpush.msra.mxu0 %v188
    %1000 = vmatmul.f32.gmra.mxu0 %v115
    %v1001 = vpop.f32.mrf.mxu0
    %v1002 = vadd.f32 %v982, %v1001
    %1003 = vdwg.mxu0
    %1004 = vmatpush.msra.mxu0 %v312
    %1005 = vmatpush.msra.mxu0 %v308
    %1006 = vmatpush.msra.mxu0 %v304
    %1007 = vmatpush.msra.mxu0 %v300
    %1008 = vmatpush.msra.mxu0 %v296
    %1009 = vmatpush.msra.mxu0 %v292
    %1010 = vmatpush.msra.mxu0 %v288
    %1011 = vmatpush.msra.mxu0 %v284
    %1012 = vmatpush.msra.mxu0 %v280
    %1013 = vmatpush.msra.mxu0 %v276
    %1014 = vmatpush.msra.mxu0 %v272
    %1015 = vmatpush.msra.mxu0 %v268
    %1016 = vmatpush.msra.mxu0 %v264
    %1017 = vmatpush.msra.mxu0 %v260
    %1018 = vmatpush.msra.mxu0 %v256
    %1019 = vmatpush.msra.mxu0 %v252
    %1020 = vmatmul.f32.gmra.mxu0 %v116
    %v1021 = vpop.f32.mrf.mxu0
    %v1022 = vadd.f32 %v1002, %v1021
    %1023 = vdwg.mxu0
    %1024 = vmatpush.msra.mxu0 %v376
    %1025 = vmatpush.msra.mxu0 %v372
    %1026 = vmatpush.msra.mxu0 %v368
    %1027 = vmatpush.msra.mxu0 %v364
    %1028 = vmatpush.msra.mxu0 %v360
    %1029 = vmatpush.msra.mxu0 %v356
    %1030 = vmatpush.msra.mxu0 %v352
    %1031 = vmatpush.msra.mxu0 %v348
    %1032 = vmatpush.msra.mxu0 %v344
    %1033 = vmatpush.msra.mxu0 %v340
    %1034 = vmatpush.msra.mxu0 %v336
    %1035 = vmatpush.msra.mxu0 %v332
    %1036 = vmatpush.msra.mxu0 %v328
    %1037 = vmatpush.msra.mxu0 %v324
    %1038 = vmatpush.msra.mxu0 %v320
    %1039 = vmatpush.msra.mxu0 %v316
    %1040 = vmatmul.f32.gmra.mxu0 %v117
    %v1041 = vpop.f32.mrf.mxu0
    %v1042 = vadd.f32 %v1022, %v1041
    %1043 = vdwg.mxu0
    %1044 = vmatpush.msra.mxu0 %v440
    %1045 = vmatpush.msra.mxu0 %v436
    %1046 = vmatpush.msra.mxu0 %v432
    %1047 = vmatpush.msra.mxu0 %v428
    %1048 = vmatpush.msra.mxu0 %v424
    %1049 = vmatpush.msra.mxu0 %v420
    %1050 = vmatpush.msra.mxu0 %v416
    %1051 = vmatpush.msra.mxu0 %v412
    %1052 = vmatpush.msra.mxu0 %v408
    %1053 = vmatpush.msra.mxu0 %v404
    %1054 = vmatpush.msra.mxu0 %v400
    %1055 = vmatpush.msra.mxu0 %v396
    %1056 = vmatpush.msra.mxu0 %v392
    %1057 = vmatpush.msra.mxu0 %v388
    %1058 = vmatpush.msra.mxu0 %v384
    %1059 = vmatpush.msra.mxu0 %v380
    %1060 = vmatmul.f32.gmra.mxu0 %v118
    %v1061 = vpop.f32.mrf.mxu0
    %v1062 = vadd.f32 %v1042, %v1061
    %1063 = vdwg.mxu0
    %1064 = vmatpush.msra.mxu0 %v504
    %1065 = vmatpush.msra.mxu0 %v500
    %1066 = vmatpush.msra.mxu0 %v496
    %1067 = vmatpush.msra.mxu0 %v492
    %1068 = vmatpush.msra.mxu0 %v488
    %1069 = vmatpush.msra.mxu0 %v484
    %1070 = vmatpush.msra.mxu0 %v480
    %1071 = vmatpush.msra.mxu0 %v476
    %1072 = vmatpush.msra.mxu0 %v472
    %1073 = vmatpush.msra.mxu0 %v468
    %1074 = vmatpush.msra.mxu0 %v464
    %1075 = vmatpush.msra.mxu0 %v460
    %1076 = vmatpush.msra.mxu0 %v456
    %1077 = vmatpush.msra.mxu0 %v452
    %1078 = vmatpush.msra.mxu0 %v448
    %1079 = vmatpush.msra.mxu0 %v444
    %1080 = vmatmul.f32.gmra.mxu0 %v119
    %v1081 = vpop.f32.mrf.mxu0
    %v1082 = vadd.f32 %v1062, %v1081
    %1083 = vdwg.mxu0
    %1084 = vmatpush.msra.mxu0 %v568
    %1085 = vmatpush.msra.mxu0 %v564
    %1086 = vmatpush.msra.mxu0 %v560
    %1087 = vmatpush.msra.mxu0 %v556
    %1088 = vmatpush.msra.mxu0 %v552
    %1089 = vmatpush.msra.mxu0 %v548
    %1090 = vmatpush.msra.mxu0 %v544
    %1091 = vmatpush.msra.mxu0 %v540
    %1092 = vmatpush.msra.mxu0 %v536
    %1093 = vmatpush.msra.mxu0 %v532
    %1094 = vmatpush.msra.mxu0 %v528
    %1095 = vmatpush.msra.mxu0 %v524
    %1096 = vmatpush.msra.mxu0 %v520
    %1097 = vmatpush.msra.mxu0 %v516
    %1098 = vmatpush.msra.mxu0 %v512
    %1099 = vmatpush.msra.mxu0 %v508
    %1100 = vmatmul.f32.gmra.mxu0 %v120
    %v1101 = vpop.f32.mrf.mxu0
    %v1102 = vadd.f32 %v1082, %v1101
    %1103 = vdwg.mxu0
    %1104 = vmatpush.msra.mxu0 %v632
    %1105 = vmatpush.msra.mxu0 %v628
    %1106 = vmatpush.msra.mxu0 %v624
    %1107 = vmatpush.msra.mxu0 %v620
    %1108 = vmatpush.msra.mxu0 %v616
    %1109 = vmatpush.msra.mxu0 %v612
    %1110 = vmatpush.msra.mxu0 %v608
    %1111 = vmatpush.msra.mxu0 %v604
    %1112 = vmatpush.msra.mxu0 %v600
    %1113 = vmatpush.msra.mxu0 %v596
    %1114 = vmatpush.msra.mxu0 %v592
    %1115 = vmatpush.msra.mxu0 %v588
    %1116 = vmatpush.msra.mxu0 %v584
    %1117 = vmatpush.msra.mxu0 %v580
    %1118 = vmatpush.msra.mxu0 %v576
    %1119 = vmatpush.msra.mxu0 %v572
    %1120 = vmatmul.f32.gmra.mxu0 %v121
    %v1121 = vpop.f32.mrf.mxu0
    %v1122 = vadd.f32 %v1102, %v1121
    %1123 = vdwg.mxu0
    %1124 = vmatpush.msra.mxu0 %v185
    %1125 = vmatpush.msra.mxu0 %v181
    %1126 = vmatpush.msra.mxu0 %v177
    %1127 = vmatpush.msra.mxu0 %v173
    %1128 = vmatpush.msra.mxu0 %v169
    %1129 = vmatpush.msra.mxu0 %v165
    %1130 = vmatpush.msra.mxu0 %v161
    %1131 = vmatpush.msra.mxu0 %v157
    %1132 = vmatpush.msra.mxu0 %v153
    %1133 = vmatpush.msra.mxu0 %v149
    %1134 = vmatpush.msra.mxu0 %v145
    %1135 = vmatpush.msra.mxu0 %v141
    %1136 = vmatpush.msra.mxu0 %v137
    %1137 = vmatpush.msra.mxu0 %v133
    %1138 = vmatpush.msra.mxu0 %v129
    %1139 = vmatpush.msra.mxu0 %v125
    %1140 = vmatmul.f32.gmra.mxu0 %v114
    %v1141 = vpop.f32.mrf.mxu0
    %v1142 = vadd.f32 %v639, %v1141
    %1143 = vdwg.mxu0
    %1144 = vmatpush.msra.mxu0 %v249
    %1145 = vmatpush.msra.mxu0 %v245
    %1146 = vmatpush.msra.mxu0 %v241
    %1147 = vmatpush.msra.mxu0 %v237
    %1148 = vmatpush.msra.mxu0 %v233
    %1149 = vmatpush.msra.mxu0 %v229
    %1150 = vmatpush.msra.mxu0 %v225
    %1151 = vmatpush.msra.mxu0 %v221
    %1152 = vmatpush.msra.mxu0 %v217
    %1153 = vmatpush.msra.mxu0 %v213
    %1154 = vmatpush.msra.mxu0 %v209
    %1155 = vmatpush.msra.mxu0 %v205
    %1156 = vmatpush.msra.mxu0 %v201
    %1157 = vmatpush.msra.mxu0 %v197
    %1158 = vmatpush.msra.mxu0 %v193
    %1159 = vmatpush.msra.mxu0 %v189
    %1160 = vmatmul.f32.gmra.mxu0 %v115
    %v1161 = vpop.f32.mrf.mxu0
    %v1162 = vadd.f32 %v1142, %v1161
    %1163 = vdwg.mxu0
    %1164 = vmatpush.msra.mxu0 %v313
    %1165 = vmatpush.msra.mxu0 %v309
    %1166 = vmatpush.msra.mxu0 %v305
    %1167 = vmatpush.msra.mxu0 %v301
    %1168 = vmatpush.msra.mxu0 %v297
    %1169 = vmatpush.msra.mxu0 %v293
    %1170 = vmatpush.msra.mxu0 %v289
    %1171 = vmatpush.msra.mxu0 %v285
    %1172 = vmatpush.msra.mxu0 %v281
    %1173 = vmatpush.msra.mxu0 %v277
    %1174 = vmatpush.msra.mxu0 %v273
    %1175 = vmatpush.msra.mxu0 %v269
    %1176 = vmatpush.msra.mxu0 %v265
    %1177 = vmatpush.msra.mxu0 %v261
    %1178 = vmatpush.msra.mxu0 %v257
    %1179 = vmatpush.msra.mxu0 %v253
    %1180 = vmatmul.f32.gmra.mxu0 %v116
    %v1181 = vpop.f32.mrf.mxu0
    %v1182 = vadd.f32 %v1162, %v1181
    %1183 = vdwg.mxu0
    %1184 = vmatpush.msra.mxu0 %v377
    %1185 = vmatpush.msra.mxu0 %v373
    %1186 = vmatpush.msra.mxu0 %v369
    %1187 = vmatpush.msra.mxu0 %v365
    %1188 = vmatpush.msra.mxu0 %v361
    %1189 = vmatpush.msra.mxu0 %v357
    %1190 = vmatpush.msra.mxu0 %v353
    %1191 = vmatpush.msra.mxu0 %v349
    %1192 = vmatpush.msra.mxu0 %v345
    %1193 = vmatpush.msra.mxu0 %v341
    %1194 = vmatpush.msra.mxu0 %v337
    %1195 = vmatpush.msra.mxu0 %v333
    %1196 = vmatpush.msra.mxu0 %v329
    %1197 = vmatpush.msra.mxu0 %v325
    %1198 = vmatpush.msra.mxu0 %v321
    %1199 = vmatpush.msra.mxu0 %v317
    %1200 = vmatmul.f32.gmra.mxu0 %v117
    %v1201 = vpop.f32.mrf.mxu0
    %v1202 = vadd.f32 %v1182, %v1201
    %1203 = vdwg.mxu0
    %1204 = vmatpush.msra.mxu0 %v441
    %1205 = vmatpush.msra.mxu0 %v437
    %1206 = vmatpush.msra.mxu0 %v433
    %1207 = vmatpush.msra.mxu0 %v429
    %1208 = vmatpush.msra.mxu0 %v425
    %1209 = vmatpush.msra.mxu0 %v421
    %1210 = vmatpush.msra.mxu0 %v417
    %1211 = vmatpush.msra.mxu0 %v413
    %1212 = vmatpush.msra.mxu0 %v409
    %1213 = vmatpush.msra.mxu0 %v405
    %1214 = vmatpush.msra.mxu0 %v401
    %1215 = vmatpush.msra.mxu0 %v397
    %1216 = vmatpush.msra.mxu0 %v393
    %1217 = vmatpush.msra.mxu0 %v389
    %1218 = vmatpush.msra.mxu0 %v385
    %1219 = vmatpush.msra.mxu0 %v381
    %1220 = vmatmul.f32.gmra.mxu0 %v118
    %v1221 = vpop.f32.mrf.mxu0
    %v1222 = vadd.f32 %v1202, %v1221
    %1223 = vdwg.mxu0
    %1224 = vmatpush.msra.mxu0 %v505
    %1225 = vmatpush.msra.mxu0 %v501
    %1226 = vmatpush.msra.mxu0 %v497
    %1227 = vmatpush.msra.mxu0 %v493
    %1228 = vmatpush.msra.mxu0 %v489
    %1229 = vmatpush.msra.mxu0 %v485
    %1230 = vmatpush.msra.mxu0 %v481
    %1231 = vmatpush.msra.mxu0 %v477
    %1232 = vmatpush.msra.mxu0 %v473
    %1233 = vmatpush.msra.mxu0 %v469
    %1234 = vmatpush.msra.mxu0 %v465
    %1235 = vmatpush.msra.mxu0 %v461
    %1236 = vmatpush.msra.mxu0 %v457
    %1237 = vmatpush.msra.mxu0 %v453
    %1238 = vmatpush.msra.mxu0 %v449
    %1239 = vmatpush.msra.mxu0 %v445
    %1240 = vmatmul.f32.gmra.mxu0 %v119
    %v1241 = vpop.f32.mrf.mxu0
    %v1242 = vadd.f32 %v1222, %v1241
    %1243 = vdwg.mxu0
    %1244 = vmatpush.msra.mxu0 %v569
    %1245 = vmatpush.msra.mxu0 %v565
    %1246 = vmatpush.msra.mxu0 %v561
    %1247 = vmatpush.msra.mxu0 %v557
    %1248 = vmatpush.msra.mxu0 %v553
    %1249 = vmatpush.msra.mxu0 %v549
    %1250 = vmatpush.msra.mxu0 %v545
    %1251 = vmatpush.msra.mxu0 %v541
    %1252 = vmatpush.msra.mxu0 %v537
    %1253 = vmatpush.msra.mxu0 %v533
    %1254 = vmatpush.msra.mxu0 %v529
    %1255 = vmatpush.msra.mxu0 %v525
    %1256 = vmatpush.msra.mxu0 %v521
    %1257 = vmatpush.msra.mxu0 %v517
    %1258 = vmatpush.msra.mxu0 %v513
    %1259 = vmatpush.msra.mxu0 %v509
    %1260 = vmatmul.f32.gmra.mxu0 %v120
    %v1261 = vpop.f32.mrf.mxu0
    %v1262 = vadd.f32 %v1242, %v1261
    %1263 = vdwg.mxu0
    %1264 = vmatpush.msra.mxu0 %v633
    %1265 = vmatpush.msra.mxu0 %v629
    %1266 = vmatpush.msra.mxu0 %v625
    %1267 = vmatpush.msra.mxu0 %v621
    %1268 = vmatpush.msra.mxu0 %v617
    %1269 = vmatpush.msra.mxu0 %v613
    %1270 = vmatpush.msra.mxu0 %v609
    %1271 = vmatpush.msra.mxu0 %v605
    %1272 = vmatpush.msra.mxu0 %v601
    %1273 = vmatpush.msra.mxu0 %v597
    %1274 = vmatpush.msra.mxu0 %v593
    %1275 = vmatpush.msra.mxu0 %v589
    %1276 = vmatpush.msra.mxu0 %v585
    %1277 = vmatpush.msra.mxu0 %v581
    %1278 = vmatpush.msra.mxu0 %v577
    %1279 = vmatpush.msra.mxu0 %v573
    %1280 = vmatmul.f32.gmra.mxu0 %v121
    %v1281 = vpop.f32.mrf.mxu0
    %v1282 = vadd.f32 %v1262, %v1281
    %1283 = vdwg.mxu0
    %vm1284 = vcmp.gt.f32.partialorder %v802, 0.0
    %vm1285 = vcmp.gt.f32.partialorder %v962, 0.0
    %vm1286 = vcmp.gt.f32.partialorder %v1122, 0.0
    %vm1287 = vcmp.gt.f32.partialorder %v1282, 0.0
    %v1288 = vmul.f32 %v802, 0.2
    %v1289 = vmul.f32 %v962, 0.2
    %v1290 = vmul.f32 %v1122, 0.2
    %v1291 = vmul.f32 %v1282, 0.2
    %v1292 = vsel %vm1284, %v802, %v1288
    %v1293 = vsel %vm1285, %v962, %v1289
    %v1294 = vsel %vm1286, %v1122, %v1290
    %v1295 = vsel %vm1287, %v1282, %v1291
    %v1296 = vld [vmem:[#allocation8] sm:$0xff]
    %v1297 = vld [vmem:[#allocation8 + $0x8] sm:$0xff]
    %v1298 = vld [vmem:[#allocation8 + $0x10] sm:$0xff]
    %v1299 = vld [vmem:[#allocation8 + $0x18] sm:$0xff]
    %v1300 = vld [vmem:[#allocation8 + $0x20] sm:$0xff]
    %v1301 = vld [vmem:[#allocation8 + $0x28] sm:$0xff]
    %v1302 = vld [vmem:[#allocation8 + $0x30] sm:$0xff]
    %v1303 = vld [vmem:[#allocation8 + $0x38] sm:$0xff]
    %v1304 = vld [vmem:[#allocation8 + $0x40] sm:$0xff]
    %v1305 = vld [vmem:[#allocation8 + $0x48] sm:$0xff]
    %v1306 = vld [vmem:[#allocation8 + $0x50] sm:$0xff]
    %v1307 = vld [vmem:[#allocation8 + $0x58] sm:$0xff]
    %v1308 = vld [vmem:[#allocation8 + $0x60] sm:$0xff]
    %v1309 = vld [vmem:[#allocation8 + $0x68] sm:$0xff]
    %v1310 = vld [vmem:[#allocation8 + $0x70] sm:$0xff]
    %v1311 = vld [vmem:[#allocation8 + $0x78] sm:$0xff]
    %v1312 = vld [vmem:[#allocation8 + $0x80] sm:$0xff]
    %v1313 = vld [vmem:[#allocation8 + $0x88] sm:$0xff]
    %v1314 = vld [vmem:[#allocation8 + $0x90] sm:$0xff]
    %v1315 = vld [vmem:[#allocation8 + $0x98] sm:$0xff]
    %v1316 = vld [vmem:[#allocation8 + $0xa0] sm:$0xff]
    %v1317 = vld [vmem:[#allocation8 + $0xa8] sm:$0xff]
    %v1318 = vld [vmem:[#allocation8 + $0xb0] sm:$0xff]
    %v1319 = vld [vmem:[#allocation8 + $0xb8] sm:$0xff]
    %v1320 = vld [vmem:[#allocation8 + $0xc0] sm:$0xff]
    %v1321 = vld [vmem:[#allocation8 + $0xc8] sm:$0xff]
    %v1322 = vld [vmem:[#allocation8 + $0xd0] sm:$0xff]
    %v1323 = vld [vmem:[#allocation8 + $0xd8] sm:$0xff]
    %v1324 = vld [vmem:[#allocation8 + $0xe0] sm:$0xff]
    %v1325 = vld [vmem:[#allocation8 + $0xe8] sm:$0xff]
    %v1326 = vld [vmem:[#allocation8 + $0xf0] sm:$0xff]
    %v1327 = vld [vmem:[#allocation8 + $0xf8] sm:$0xff]
    %v1328 = vld [vmem:[#allocation8 + $0x100] sm:$0xff]
    %v1329 = vld [vmem:[#allocation8 + $0x108] sm:$0xff]
    %v1330 = vld [vmem:[#allocation8 + $0x110] sm:$0xff]
    %v1331 = vld [vmem:[#allocation8 + $0x118] sm:$0xff]
    %v1332 = vld [vmem:[#allocation8 + $0x120] sm:$0xff]
    %v1333 = vld [vmem:[#allocation8 + $0x128] sm:$0xff]
    %v1334 = vld [vmem:[#allocation8 + $0x130] sm:$0xff]
    %v1335 = vld [vmem:[#allocation8 + $0x138] sm:$0xff]
    %v1336 = vld [vmem:[#allocation8 + $0x140] sm:$0xff]
    %v1337 = vld [vmem:[#allocation8 + $0x148] sm:$0xff]
    %v1338 = vld [vmem:[#allocation8 + $0x150] sm:$0xff]
    %v1339 = vld [vmem:[#allocation8 + $0x158] sm:$0xff]
    %v1340 = vld [vmem:[#allocation8 + $0x160] sm:$0xff]
    %v1341 = vld [vmem:[#allocation8 + $0x168] sm:$0xff]
    %v1342 = vld [vmem:[#allocation8 + $0x170] sm:$0xff]
    %v1343 = vld [vmem:[#allocation8 + $0x178] sm:$0xff]
    %v1344 = vld [vmem:[#allocation8 + $0x180] sm:$0xff]
    %v1345 = vld [vmem:[#allocation8 + $0x188] sm:$0xff]
    %v1346 = vld [vmem:[#allocation8 + $0x190] sm:$0xff]
    %v1347 = vld [vmem:[#allocation8 + $0x198] sm:$0xff]
    %v1348 = vld [vmem:[#allocation8 + $0x1a0] sm:$0xff]
    %v1349 = vld [vmem:[#allocation8 + $0x1a8] sm:$0xff]
    %v1350 = vld [vmem:[#allocation8 + $0x1b0] sm:$0xff]
    %v1351 = vld [vmem:[#allocation8 + $0x1b8] sm:$0xff]
    %v1352 = vld [vmem:[#allocation8 + $0x1c0] sm:$0xff]
    %v1353 = vld [vmem:[#allocation8 + $0x1c8] sm:$0xff]
    %v1354 = vld [vmem:[#allocation8 + $0x1d0] sm:$0xff]
    %v1355 = vld [vmem:[#allocation8 + $0x1d8] sm:$0xff]
    %v1356 = vld [vmem:[#allocation8 + $0x1e0] sm:$0xff]
    %v1357 = vld [vmem:[#allocation8 + $0x1e8] sm:$0xff]
    %v1358 = vld [vmem:[#allocation8 + $0x1f0] sm:$0xff]
    %v1359 = vld [vmem:[#allocation8 + $0x1f8] sm:$0xff]
    %v1360 = vld [vmem:[#allocation8 + $0x200] sm:$0xff]
    %v1361 = vld [vmem:[#allocation8 + $0x208] sm:$0xff]
    %v1362 = vld [vmem:[#allocation8 + $0x210] sm:$0xff]
    %v1363 = vld [vmem:[#allocation8 + $0x218] sm:$0xff]
    %v1364 = vld [vmem:[#allocation8 + $0x220] sm:$0xff]
    %v1365 = vld [vmem:[#allocation8 + $0x228] sm:$0xff]
    %v1366 = vld [vmem:[#allocation8 + $0x230] sm:$0xff]
    %v1367 = vld [vmem:[#allocation8 + $0x238] sm:$0xff]
    %v1368 = vld [vmem:[#allocation8 + $0x240] sm:$0xff]
    %v1369 = vld [vmem:[#allocation8 + $0x248] sm:$0xff]
    %v1370 = vld [vmem:[#allocation8 + $0x250] sm:$0xff]
    %v1371 = vld [vmem:[#allocation8 + $0x258] sm:$0xff]
    %v1372 = vld [vmem:[#allocation8 + $0x260] sm:$0xff]
    %v1373 = vld [vmem:[#allocation8 + $0x268] sm:$0xff]
    %v1374 = vld [vmem:[#allocation8 + $0x270] sm:$0xff]
    %v1375 = vld [vmem:[#allocation8 + $0x278] sm:$0xff]
    %v1376 = vld [vmem:[#allocation8 + $0x280] sm:$0xff]
    %v1377 = vld [vmem:[#allocation8 + $0x288] sm:$0xff]
    %v1378 = vld [vmem:[#allocation8 + $0x290] sm:$0xff]
    %v1379 = vld [vmem:[#allocation8 + $0x298] sm:$0xff]
    %v1380 = vld [vmem:[#allocation8 + $0x2a0] sm:$0xff]
    %v1381 = vld [vmem:[#allocation8 + $0x2a8] sm:$0xff]
    %v1382 = vld [vmem:[#allocation8 + $0x2b0] sm:$0xff]
    %v1383 = vld [vmem:[#allocation8 + $0x2b8] sm:$0xff]
    %v1384 = vld [vmem:[#allocation8 + $0x2c0] sm:$0xff]
    %v1385 = vld [vmem:[#allocation8 + $0x2c8] sm:$0xff]
    %v1386 = vld [vmem:[#allocation8 + $0x2d0] sm:$0xff]
    %v1387 = vld [vmem:[#allocation8 + $0x2d8] sm:$0xff]
    %v1388 = vld [vmem:[#allocation8 + $0x2e0] sm:$0xff]
    %v1389 = vld [vmem:[#allocation8 + $0x2e8] sm:$0xff]
    %v1390 = vld [vmem:[#allocation8 + $0x2f0] sm:$0xff]
    %v1391 = vld [vmem:[#allocation8 + $0x2f8] sm:$0xff]
    %v1392 = vld [vmem:[#allocation8 + $0x300] sm:$0xff]
    %v1393 = vld [vmem:[#allocation8 + $0x308] sm:$0xff]
    %v1394 = vld [vmem:[#allocation8 + $0x310] sm:$0xff]
    %v1395 = vld [vmem:[#allocation8 + $0x318] sm:$0xff]
    %v1396 = vld [vmem:[#allocation8 + $0x320] sm:$0xff]
    %v1397 = vld [vmem:[#allocation8 + $0x328] sm:$0xff]
    %v1398 = vld [vmem:[#allocation8 + $0x330] sm:$0xff]
    %v1399 = vld [vmem:[#allocation8 + $0x338] sm:$0xff]
    %v1400 = vld [vmem:[#allocation8 + $0x340] sm:$0xff]
    %v1401 = vld [vmem:[#allocation8 + $0x348] sm:$0xff]
    %v1402 = vld [vmem:[#allocation8 + $0x350] sm:$0xff]
    %v1403 = vld [vmem:[#allocation8 + $0x358] sm:$0xff]
    %v1404 = vld [vmem:[#allocation8 + $0x360] sm:$0xff]
    %v1405 = vld [vmem:[#allocation8 + $0x368] sm:$0xff]
    %v1406 = vld [vmem:[#allocation8 + $0x370] sm:$0xff]
    %v1407 = vld [vmem:[#allocation8 + $0x378] sm:$0xff]
    %v1408 = vld [vmem:[#allocation8 + $0x380] sm:$0xff]
    %v1409 = vld [vmem:[#allocation8 + $0x388] sm:$0xff]
    %v1410 = vld [vmem:[#allocation8 + $0x390] sm:$0xff]
    %v1411 = vld [vmem:[#allocation8 + $0x398] sm:$0xff]
    %v1412 = vld [vmem:[#allocation8 + $0x3a0] sm:$0xff]
    %v1413 = vld [vmem:[#allocation8 + $0x3a8] sm:$0xff]
    %v1414 = vld [vmem:[#allocation8 + $0x3b0] sm:$0xff]
    %v1415 = vld [vmem:[#allocation8 + $0x3b8] sm:$0xff]
    %v1416 = vld [vmem:[#allocation8 + $0x3c0] sm:$0xff]
    %v1417 = vld [vmem:[#allocation8 + $0x3c8] sm:$0xff]
    %v1418 = vld [vmem:[#allocation8 + $0x3d0] sm:$0xff]
    %v1419 = vld [vmem:[#allocation8 + $0x3d8] sm:$0xff]
    %v1420 = vld [vmem:[#allocation8 + $0x3e0] sm:$0xff]
    %v1421 = vld [vmem:[#allocation8 + $0x3e8] sm:$0xff]
    %v1422 = vld [vmem:[#allocation8 + $0x3f0] sm:$0xff]
    %v1423 = vld [vmem:[#allocation8 + $0x3f8] sm:$0xff]
    %v1424 = vld [vmem:[#allocation10] sm:$0x3]
    %v1426 = vperm.slane %v1424, 0
    %v1427 = vperm.slane %v1424, 1
    %1430 = vmatpush.msra.mxu0 %v1326
    %1431 = vmatpush.msra.mxu0 %v1324
    %1432 = vmatpush.msra.mxu0 %v1322
    %1433 = vmatpush.msra.mxu0 %v1320
    %1434 = vmatpush.msra.mxu0 %v1318
    %1435 = vmatpush.msra.mxu0 %v1316
    %1436 = vmatpush.msra.mxu0 %v1314
    %1437 = vmatpush.msra.mxu0 %v1312
    %1438 = vmatpush.msra.mxu0 %v1310
    %1439 = vmatpush.msra.mxu0 %v1308
    %1440 = vmatpush.msra.mxu0 %v1306
    %1441 = vmatpush.msra.mxu0 %v1304
    %1442 = vmatpush.msra.mxu0 %v1302
    %1443 = vmatpush.msra.mxu0 %v1300
    %1444 = vmatpush.msra.mxu0 %v1298
    %1445 = vmatpush.msra.mxu0 %v1296
    %1446 = vmatmul.f32.gmra.mxu0 %v1292
    %v1447 = vpop.f32.mrf.mxu0
    %v1448 = vadd.f32 %v1426, %v1447
    %1449 = vdwg.mxu0
    %1450 = vmatpush.msra.mxu0 %v1358
    %1451 = vmatpush.msra.mxu0 %v1356
    %1452 = vmatpush.msra.mxu0 %v1354
    %1453 = vmatpush.msra.mxu0 %v1352
    %1454 = vmatpush.msra.mxu0 %v1350
    %1455 = vmatpush.msra.mxu0 %v1348
    %1456 = vmatpush.msra.mxu0 %v1346
    %1457 = vmatpush.msra.mxu0 %v1344
    %1458 = vmatpush.msra.mxu0 %v1342
    %1459 = vmatpush.msra.mxu0 %v1340
    %1460 = vmatpush.msra.mxu0 %v1338
    %1461 = vmatpush.msra.mxu0 %v1336
    %1462 = vmatpush.msra.mxu0 %v1334
    %1463 = vmatpush.msra.mxu0 %v1332
    %1464 = vmatpush.msra.mxu0 %v1330
    %1465 = vmatpush.msra.mxu0 %v1328
    %1466 = vmatmul.f32.gmra.mxu0 %v1293
    %v1467 = vpop.f32.mrf.mxu0
    %v1468 = vadd.f32 %v1448, %v1467
    %1469 = vdwg.mxu0
    %1470 = vmatpush.msra.mxu0 %v1390
    %1471 = vmatpush.msra.mxu0 %v1388
    %1472 = vmatpush.msra.mxu0 %v1386
    %1473 = vmatpush.msra.mxu0 %v1384
    %1474 = vmatpush.msra.mxu0 %v1382
    %1475 = vmatpush.msra.mxu0 %v1380
    %1476 = vmatpush.msra.mxu0 %v1378
    %1477 = vmatpush.msra.mxu0 %v1376
    %1478 = vmatpush.msra.mxu0 %v1374
    %1479 = vmatpush.msra.mxu0 %v1372
    %1480 = vmatpush.msra.mxu0 %v1370
    %1481 = vmatpush.msra.mxu0 %v1368
    %1482 = vmatpush.msra.mxu0 %v1366
    %1483 = vmatpush.msra.mxu0 %v1364
    %1484 = vmatpush.msra.mxu0 %v1362
    %1485 = vmatpush.msra.mxu0 %v1360
    %1486 = vmatmul.f32.gmra.mxu0 %v1294
    %v1487 = vpop.f32.mrf.mxu0
    %v1488 = vadd.f32 %v1468, %v1487
    %1489 = vdwg.mxu0
    %1490 = vmatpush.msra.mxu0 %v1422
    %1491 = vmatpush.msra.mxu0 %v1420
    %1492 = vmatpush.msra.mxu0 %v1418
    %1493 = vmatpush.msra.mxu0 %v1416
    %1494 = vmatpush.msra.mxu0 %v1414
    %1495 = vmatpush.msra.mxu0 %v1412
    %1496 = vmatpush.msra.mxu0 %v1410
    %1497 = vmatpush.msra.mxu0 %v1408
    %1498 = vmatpush.msra.mxu0 %v1406
    %1499 = vmatpush.msra.mxu0 %v1404
    %1500 = vmatpush.msra.mxu0 %v1402
    %1501 = vmatpush.msra.mxu0 %v1400
    %1502 = vmatpush.msra.mxu0 %v1398
    %1503 = vmatpush.msra.mxu0 %v1396
    %1504 = vmatpush.msra.mxu0 %v1394
    %1505 = vmatpush.msra.mxu0 %v1392
    %1506 = vmatmul.f32.gmra.mxu0 %v1295
    %v1507 = vpop.f32.mrf.mxu0
    %v1508 = vadd.f32 %v1488, %v1507
    %1509 = vdwg.mxu0
    %1510 = vmatpush.msra.mxu0 %v1327
    %1511 = vmatpush.msra.mxu0 %v1325
    %1512 = vmatpush.msra.mxu0 %v1323
    %1513 = vmatpush.msra.mxu0 %v1321
    %1514 = vmatpush.msra.mxu0 %v1319
    %1515 = vmatpush.msra.mxu0 %v1317
    %1516 = vmatpush.msra.mxu0 %v1315
    %1517 = vmatpush.msra.mxu0 %v1313
    %1518 = vmatpush.msra.mxu0 %v1311
    %1519 = vmatpush.msra.mxu0 %v1309
    %1520 = vmatpush.msra.mxu0 %v1307
    %1521 = vmatpush.msra.mxu0 %v1305
    %1522 = vmatpush.msra.mxu0 %v1303
    %1523 = vmatpush.msra.mxu0 %v1301
    %1524 = vmatpush.msra.mxu0 %v1299
    %1525 = vmatpush.msra.mxu0 %v1297
    %1526 = vmatmul.f32.gmra.mxu0 %v1292
    %v1527 = vpop.f32.mrf.mxu0
    %v1528 = vadd.f32 %v1427, %v1527
    %1529 = vdwg.mxu0
    %1530 = vmatpush.msra.mxu0 %v1359
    %1531 = vmatpush.msra.mxu0 %v1357
    %1532 = vmatpush.msra.mxu0 %v1355
    %1533 = vmatpush.msra.mxu0 %v1353
    %1534 = vmatpush.msra.mxu0 %v1351
    %1535 = vmatpush.msra.mxu0 %v1349
    %1536 = vmatpush.msra.mxu0 %v1347
    %1537 = vmatpush.msra.mxu0 %v1345
    %1538 = vmatpush.msra.mxu0 %v1343
    %1539 = vmatpush.msra.mxu0 %v1341
    %1540 = vmatpush.msra.mxu0 %v1339
    %1541 = vmatpush.msra.mxu0 %v1337
    %1542 = vmatpush.msra.mxu0 %v1335
    %1543 = vmatpush.msra.mxu0 %v1333
    %1544 = vmatpush.msra.mxu0 %v1331
    %1545 = vmatpush.msra.mxu0 %v1329
    %1546 = vmatmul.f32.gmra.mxu0 %v1293
    %v1547 = vpop.f32.mrf.mxu0
    %v1548 = vadd.f32 %v1528, %v1547
    %1549 = vdwg.mxu0
    %1550 = vmatpush.msra.mxu0 %v1391
    %1551 = vmatpush.msra.mxu0 %v1389
    %1552 = vmatpush.msra.mxu0 %v1387
    %1553 = vmatpush.msra.mxu0 %v1385
    %1554 = vmatpush.msra.mxu0 %v1383
    %1555 = vmatpush.msra.mxu0 %v1381
    %1556 = vmatpush.msra.mxu0 %v1379
    %1557 = vmatpush.msra.mxu0 %v1377
    %1558 = vmatpush.msra.mxu0 %v1375
    %1559 = vmatpush.msra.mxu0 %v1373
    %1560 = vmatpush.msra.mxu0 %v1371
    %1561 = vmatpush.msra.mxu0 %v1369
    %1562 = vmatpush.msra.mxu0 %v1367
    %1563 = vmatpush.msra.mxu0 %v1365
    %1564 = vmatpush.msra.mxu0 %v1363
    %1565 = vmatpush.msra.mxu0 %v1361
    %1566 = vmatmul.f32.gmra.mxu0 %v1294
    %v1567 = vpop.f32.mrf.mxu0
    %v1568 = vadd.f32 %v1548, %v1567
    %1569 = vdwg.mxu0
    %1570 = vmatpush.msra.mxu0 %v1423
    %1571 = vmatpush.msra.mxu0 %v1421
    %1572 = vmatpush.msra.mxu0 %v1419
    %1573 = vmatpush.msra.mxu0 %v1417
    %1574 = vmatpush.msra.mxu0 %v1415
    %1575 = vmatpush.msra.mxu0 %v1413
    %1576 = vmatpush.msra.mxu0 %v1411
    %1577 = vmatpush.msra.mxu0 %v1409
    %1578 = vmatpush.msra.mxu0 %v1407
    %1579 = vmatpush.msra.mxu0 %v1405
    %1580 = vmatpush.msra.mxu0 %v1403
    %1581 = vmatpush.msra.mxu0 %v1401
    %1582 = vmatpush.msra.mxu0 %v1399
    %1583 = vmatpush.msra.mxu0 %v1397
    %1584 = vmatpush.msra.mxu0 %v1395
    %1585 = vmatpush.msra.mxu0 %v1393
    %1586 = vmatmul.f32.gmra.mxu0 %v1295
    %v1587 = vpop.f32.mrf.mxu0
    %v1588 = vadd.f32 %v1568, %v1587
    %1589 = vdwg.mxu0
    %vm1590 = vcmp.gt.f32.partialorder %v1508, 0.0
    %vm1591 = vcmp.gt.f32.partialorder %v1588, 0.0
    %v1592 = vmul.f32 %v1508, 0.2
    %v1593 = vmul.f32 %v1588, 0.2
    %v1594 = vsel %vm1590, %v1508, %v1592
    %v1595 = vsel %vm1591, %v1588, %v1593
    %v1596 = vld [vmem:[#allocation11] sm:$0x3]
    %v1598 = vperm.slane %v1596, 0
    %v1599 = vperm.slane %v1596, 1
    %v1602 = vmul.f32 %v1594, %v1598
    %v1603 = vmul.f32 %v1595, %v1599
    %v1604 = vadd.f32 %v1602, %v1603
    %1605 = vadd.xlane.f32.xlu0 %v1604
    %v1606 = vpop.xlane.xlu0 %1605
    %v1607 = vld [vmem:[#allocation2] sm:$0x1]
    %v1609 = vperm.slane %v1607, 0
    %v1611 = vadd.f32 %v1606, %v1609
    %v1612 = vsub.f32 0.0, %v1611
    %v1613 = vmul.f32 %v1612, 1.442695
    %v1614 = vpow.pop %v1613
    %v1615 = vadd.f32 %v1614, 1.0
    %v1616 = vrcp.pop %v1615
    %vm1617 = vcmask 7168
    %1618 = vst.msk [vmem:[%s7] sm:$0xff] %vm1617, %v1616
    // Predicated region
    $region54: #{tpu_custom_call.1} parent=1 // pred_check
      _
    $region55: #{tpu_custom_call.1} parent=1 // pred_check_branch
      %1620 = sbr.rel (0) target = $region57
    $region56: #{tpu_custom_call.1} parent=1 // pred_region
      _
    $region57: #{tpu_custom_call.1} parent=1 // pred_fallthru
      _
    // Predicated region
    $region58: #{tpu_custom_call.1} parent=1 // pred_check
      _
    $region59: #{tpu_custom_call.1} parent=1 // pred_check_branch
      %1622 = sbr.rel (0) target = $region61
    $region60: #{tpu_custom_call.1} parent=1 // pred_region
      _
    $region61: #{tpu_custom_call.1} parent=1 // pred_fallthru
      _
    %1623 = vsyncpa [#allocation4], 1
    %1624 = vsyncpa [#allocation6], 1
    %1625 = vsyncpa [#allocation9], 1
    %1626 = vsyncpa [#allocation12], 1

</llo_original>
